<compile_context>
chip_gen: v7x
topology: tpu7x:2x2x1
jax: 0.10.0
libtpu: 0.0.40
codegen_flags: <defaults>
</compile_context>

<pallas_src>
import functools

import jax
import jax.numpy as jnp
from jax.experimental import pallas as pl
from jax.experimental.pallas import tpu as pltpu


# ----------------------------------------------------------------------------
# Pallas kernel: fused bidirectional LSTM recurrence + head linears
# ----------------------------------------------------------------------------
def _bilstm_kernel(xp_ref,      # (T, B, 8H) x@W_ih^T + (b_ih+b_hh), gate order
                                #            [i_f i_b | f_f f_b | o_f o_b | g_f g_b],
                                #            backward half already time-reversed
                   w_blk_ref,   # (2H, 8H)  blockdiag(W_hh_f^T, W_hh_b^T), same column order
                   w_head_ref,  # (4H, 2H)  blockdiag(W_hidden^T, W_cell^T)
                   b_head_ref,  # (1, 2H)   [b_hidden | b_cell]
                   out_ref,     # (T, B, 2H) sequence output, lanes [fwd | bwd]
                   hc_ref):     # (B, 2H)   [ht | ct] after head linears
    T, B, _ = xp_ref.shape
    H2 = w_blk_ref.shape[0]          # 2H (fused fwd+bwd carry width)
    H = H2 // 2
    S = 3 * H2                       # width of the contiguous sigmoid block (i, f, o)

    w_blk = w_blk_ref[...]           # hoist the recurrent weight load out of the loop

    def body(t, carry):
        h, c = carry                 # h = [h_f | h_b], c = [c_f | c_b]   (B, 2H)
        tb = T - 1 - t
        # The only op on the serial chain: one fused (B,2H)@(2H,8H) MXU push.
        g = xp_ref[t] + jnp.dot(h, w_blk, preferred_element_type=jnp.float32)
        sg = jax.nn.sigmoid(g[:, 0:S])            # [ i | f | o ], each a (B, 2H) slab
        gg = jnp.tanh(g[:, S:S + H2])             # g gate, (B, 2H)
        c = sg[:, H2:2 * H2] * c + sg[:, 0:H2] * gg
        h = sg[:, 2 * H2:S] * jnp.tanh(c)
        # Direct per-step stores (no scratch, no final concat / extra VMEM pass).
        out_ref[t, :, 0:H] = h[:, 0:H]            # forward hidden at time t
        out_ref[tb, :, H:H2] = h[:, H:H2]         # backward hidden at time T-1-t
        return (h, c)

    z = jnp.zeros((B, H2), jnp.float32)
    h, c = jax.lax.fori_loop(0, T, body, (z, z), unroll=min(8, T))

    # Fused heads: [ht | ct] = [h_f, h_b, c_f, c_b] @ blockdiag(Wh^T, Wc^T) + [bh | bc]
    hc = jnp.concatenate([h, c], axis=-1)         # (B, 4H) = [h_f h_b c_f c_b]
    hc_ref[...] = (jnp.dot(hc, w_head_ref[...], preferred_element_type=jnp.float32)
                   + b_head_ref[...])


# ----------------------------------------------------------------------------
# Wrapper (forward pass of the module)
# ----------------------------------------------------------------------------
def _permute_gate_rows(w):
    """PyTorch LSTM gate row-blocks (i, f, g, o) -> (i, f, o, g)."""
    i, f, g, o = jnp.split(w, 4, axis=0)
    return jnp.concatenate([i, f, o, g], axis=0)


def lstm_encoder_forward(tokens, params):
    """Reproduces LSTMEncoder.forward (eval-mode dropout).

    tokens: (B, T) int32
    Returns: encoder_out (B, T, 2H), (ht (1, B, H), ct (1, B, H))
    """
    # Embedding lookup (glue; padding_idx=0 row is zero in the table).
    emb = jnp.take(params["embedding"], tokens, axis=0).astype(jnp.float32)   # (B, T, E)
    # TODO(synk): training-mode dropout; eval mode -> identity.
    x_tbe = jnp.transpose(emb, (1, 0, 2))                                     # (T, B, E)
    T, B, _ = x_tbe.shape
    H = params["w_hh_f"].shape[1]
    f32 = jnp.float32

    # ---- batched input projection for all timesteps & both directions -------
    wih_f = _permute_gate_rows(params["w_ih_f"]).astype(f32)                  # (4H, E)
    wih_b = _permute_gate_rows(params["w_ih_b"]).astype(f32)
    b_f = _permute_gate_rows((params["b_ih_f"] + params["b_hh_f"])[:, None])[:, 0]
    b_b = _permute_gate_rows((params["b_ih_b"] + params["b_hh_b"])[:, None])[:, 0]
    xp_f = jnp.einsum("tbe,ge->tbg", x_tbe, wih_f) + b_f                      # (T, B, 4H)
    xp_b = jnp.einsum("tbe,ge->tbg", x_tbe, wih_b) + b_b                      # (T, B, 4H)
    xp_b = xp_b[::-1]                              # backward direction runs t = T-1 .. 0
    # Interleave per gate across directions -> [i_f i_b | f_f f_b | o_f o_b | g_f g_b].
    xp = jnp.stack([xp_f.reshape(T, B, 4, H), xp_b.reshape(T, B, 4, H)], axis=3)
    xp = xp.reshape(T, B, 8 * H)

    # ---- blockdiag recurrent weight (one fused matmul per step) --------------
    whh_f_t = _permute_gate_rows(params["w_hh_f"]).astype(f32).T              # (H, 4H)
    whh_b_t = _permute_gate_rows(params["w_hh_b"]).astype(f32).T
    w_blk = jnp.zeros((2 * H, 4, 2, H), f32)
    w_blk = w_blk.at[:H, :, 0, :].set(whh_f_t.reshape(H, 4, H))
    w_blk = w_blk.at[H:, :, 1, :].set(whh_b_t.reshape(H, 4, H))
    w_blk = w_blk.reshape(2 * H, 8 * H)
    # TODO(synk): on v6e/v7x with large H, cast w_blk (and the h operand) to bf16 with
    # f32 accumulation; skipped (latency-bound small shapes; v5e VPU/EUP have no bf16).

    # ---- blockdiag head weight ------------------------------------------------
    w_head = jnp.zeros((4 * H, 2 * H), f32)
    w_head = w_head.at[:2 * H, :H].set(params["w_hidden"].T.astype(f32))
    w_head = w_head.at[2 * H:, H:].set(params["w_cell"].T.astype(f32))
    b_head = jnp.concatenate([params["b_hidden"], params["b_cell"]]).astype(f32)[None, :]

    # ---- VMEM budget sized from the actual resident buffers --------------------
    buf_bytes = 4 * (xp.size + w_blk.size + w_head.size + b_head.size
                     + T * B * 2 * H + B * 2 * H)
    vmem_limit = int(min(64 * 1024 * 1024, max(4 * 1024 * 1024, buf_bytes + (2 << 20))))

    vmem = pl.BlockSpec(memory_space=pltpu.MemorySpace.VMEM)
    out_tb, hc = pl.pallas_call(
        _bilstm_kernel,
        out_shape=(
            jax.ShapeDtypeStruct((T, B, 2 * H), jnp.float32),
            jax.ShapeDtypeStruct((B, 2 * H), jnp.float32),
        ),
        in_specs=[vmem, vmem, vmem, vmem],
        out_specs=(vmem, vmem),
        compiler_params=pltpu.CompilerParams(vmem_limit_bytes=vmem_limit),
    )(xp, w_blk, w_head, b_head)

    # TODO(synk): emit batch-first output directly from the kernel (dynamic-sublane
    # stores) to drop this transpose; kept time-major leading-index per-step stores
    # for robust lowering.
    encoder_out = jnp.transpose(out_tb, (1, 0, 2))        # (B, T, 2H), batch_first
    ht = hc[:, :H][None]                                  # (1, B, H)
    ct = hc[:, H:][None]                                  # (1, B, H)
    return encoder_out, (ht, ct)


# ----------------------------------------------------------------------------
# Pure-JAX reference (correctness sanity check)
# ----------------------------------------------------------------------------
def _ref_forward(tokens, params):
    emb = jnp.take(params["embedding"], tokens, axis=0).astype(jnp.float32)
    x = jnp.transpose(emb, (1, 0, 2))
    H = params["w_hh_f"].shape[1]

    def run_dir(x_seq, wih, whh, bih, bhh):
        def step(carry, x_t):
            h, c = carry
            g = x_t @ wih.T + h @ whh.T + bih + bhh
            i = jax.nn.sigmoid(g[:, :H])
            f = jax.nn.sigmoid(g[:, H:2 * H])
            gg = jnp.tanh(g[:, 2 * H:3 * H])
            o = jax.nn.sigmoid(g[:, 3 * H:])
            c = f * c + i * gg
            h = o * jnp.tanh(c)
            return (h, c), h

        B = x_seq.shape[1]
        init = (jnp.zeros((B, H), jnp.float32), jnp.zeros((B, H), jnp.float32))
        (h, c), outs = jax.lax.scan(step, init, x_seq)
        return outs, h, c

    out_f, hf, cf = run_dir(x, params["w_ih_f"], params["w_hh_f"],
                            params["b_ih_f"], params["b_hh_f"])
    out_r, hb, cb = run_dir(x[::-1], params["w_ih_b"], params["w_hh_b"],
                            params["b_ih_b"], params["b_hh_b"])
    out_b = out_r[::-1]
    enc = jnp.transpose(jnp.concatenate([out_f, out_b], -1), (1, 0, 2))
    ht = jnp.concatenate([hf, hb], -1) @ params["w_hidden"].T + params["b_hidden"]
    ct = jnp.concatenate([cf, cb], -1) @ params["w_cell"].T + params["b_cell"]
    return enc, (ht[None], ct[None])


# ----------------------------------------------------------------------------
# Deterministic parameter init (shapes per the module's __init__)
# ----------------------------------------------------------------------------
def init_params(key, input_size, embed_dim, hidden_units):
    ks = jax.random.split(key, 16)
    k_lstm = 1.0 / jnp.sqrt(hidden_units)
    k_lin = 1.0 / jnp.sqrt(2 * hidden_units)

    def u(k, shape, bound):
        return jax.random.uniform(k, shape, jnp.float32, -bound, bound)

    emb = jax.random.normal(ks[0], (input_size, embed_dim), jnp.float32)
    emb = emb.at[0].set(0.0)                                 # padding_idx=0

    return {
        "embedding": emb,
        # forward direction
        "w_ih_f": u(ks[1], (4 * hidden_units, embed_dim), k_lstm),
        "w_hh_f": u(ks[2], (4 * hidden_units, hidden_units), k_lstm),
        "b_ih_f": u(ks[3], (4 * hidden_units,), k_lstm),
        "b_hh_f": u(ks[4], (4 * hidden_units,), k_lstm),
        # backward direction
        "w_ih_b": u(ks[5], (4 * hidden_units, embed_dim), k_lstm),
        "w_hh_b": u(ks[6], (4 * hidden_units, hidden_units), k_lstm),
        "b_ih_b": u(ks[7], (4 * hidden_units,), k_lstm),
        "b_hh_b": u(ks[8], (4 * hidden_units,), k_lstm),
        # heads: Linear(2H, H)
        "w_hidden": u(ks[9], (hidden_units, 2 * hidden_units), k_lin),
        "b_hidden": u(ks[10], (hidden_units,), k_lin),
        "w_cell": u(ks[11], (hidden_units, 2 * hidden_units), k_lin),
        "b_cell": u(ks[12], (hidden_units,), k_lin),
    }


if __name__ == "__main__":
    INPUT_SIZE = 50      # vocab size
    EMBED_DIM = 32
    HIDDEN = 32
    B, T = 2, 8          # NOTE: larger B (>= 8) is the biggest end-to-end throughput
                         # lever at the call site; the kernel itself needs no change.

    key = jax.random.PRNGKey(0)
    k_par, k_tok = jax.random.split(key)
    params = init_params(k_par, INPUT_SIZE, EMBED_DIM, HIDDEN)
    tokens = jax.random.randint(k_tok, (B, T), 0, INPUT_SIZE, dtype=jnp.int32)

    fwd = jax.jit(functools.partial(lstm_encoder_forward, params=params))
    encoder_out, (ht, ct) = fwd(tokens)
    jax.block_until_ready((encoder_out, ht, ct))

    assert encoder_out.shape == (B, T, 2 * HIDDEN)
    assert ht.shape == (1, B, HIDDEN)
    assert ct.shape == (1, B, HIDDEN)

    # Sanity check against a pure-JAX reference (tolerant of MXU f32 accumulation).
    enc_ref, (ht_ref, ct_ref) = _ref_forward(tokens, params)
    assert jnp.allclose(encoder_out, enc_ref, atol=1e-3, rtol=1e-3)
    assert jnp.allclose(ht, ht_ref, atol=1e-3, rtol=1e-3)
    assert jnp.allclose(ct, ct_ref, atol=1e-3, rtol=1e-3)

    print("KERNEL_OK")
</pallas_src>

<mosaic_0001>
module attributes {stable_mosaic.version = 11 : i64} {
  func.func @_bilstm_kernel(%arg0: memref<8x2x256xf32, #tpu.memory_space<vmem>>, %arg1: memref<64x256xf32, #tpu.memory_space<vmem>>, %arg2: memref<128x64xf32, #tpu.memory_space<vmem>>, %arg3: memref<1x64xf32, #tpu.memory_space<vmem>>, %arg4: memref<8x2x64xf32, #tpu.memory_space<vmem>>, %arg5: memref<2x64xf32, #tpu.memory_space<vmem>>) attributes {dimension_semantics = [], scalar_prefetch = 0 : i64, scratch_operands = 0 : i64, tpu.core_type = #tpu.core_type<tc>} {
    %c0 = arith.constant 0 : index
    %c0_0 = arith.constant 0 : index
    %0 = vector.load %arg1[%c0, %c0_0] : memref<64x256xf32, #tpu.memory_space<vmem>>, vector<64x256xf32>
    %cst = arith.constant 0.000000e+00 : f32
    %1 = vector.broadcast %cst : f32 to vector<2x64xf32>
    %c0_i32 = arith.constant 0 : i32
    %c7_i32 = arith.constant 7 : i32
    %2 = arith.subi %c7_i32, %c0_i32 : i32
    %3 = arith.index_cast %c0_i32 : i32 to index
    %c0_1 = arith.constant 0 : index
    %c0_2 = arith.constant 0 : index
    %4 = vector.load %arg0[%3, %c0_1, %c0_2] : memref<8x2x256xf32, #tpu.memory_space<vmem>>, vector<1x2x256xf32>
    %5 = vector.shape_cast %4 : vector<1x2x256xf32> to vector<2x256xf32>
    %cst_3 = arith.constant dense<0.000000e+00> : vector<2x256xf32>
    %6 = tpu.matmul %1, %0, %cst_3 {dimension_numbers = #tpu.dot_dimension_numbers<[1], [0], [0], [1], [0, 0, 1, 1], [], []>} : vector<2x64xf32>, vector<64x256xf32>, vector<2x256xf32> -> vector<2x256xf32>
    %7 = arith.addf %5, %6 : vector<2x256xf32>
    %8 = vector.extract_strided_slice %7 {offsets = [0, 0], sizes = [2, 192], strides = [1, 1]} : vector<2x256xf32> to vector<2x192xf32>
    %9 = arith.negf %8 : vector<2x192xf32>
    %10 = math.exp %9 : vector<2x192xf32>
    %cst_4 = arith.constant 1.000000e+00 : f32
    %11 = vector.broadcast %cst_4 : f32 to vector<2x192xf32>
    %12 = arith.addf %11, %10 : vector<2x192xf32>
    %13 = arith.divf %11, %12 : vector<2x192xf32>
    %14 = vector.extract_strided_slice %7 {offsets = [0, 192], sizes = [2, 64], strides = [1, 1]} : vector<2x256xf32> to vector<2x64xf32>
    %15 = math.tanh %14 : vector<2x64xf32>
    %16 = vector.extract_strided_slice %13 {offsets = [0, 64], sizes = [2, 64], strides = [1, 1]} : vector<2x192xf32> to vector<2x64xf32>
    %17 = arith.mulf %16, %1 : vector<2x64xf32>
    %18 = vector.extract_strided_slice %13 {offsets = [0, 0], sizes = [2, 64], strides = [1, 1]} : vector<2x192xf32> to vector<2x64xf32>
    %19 = arith.mulf %18, %15 : vector<2x64xf32>
    %20 = arith.addf %17, %19 : vector<2x64xf32>
    %21 = vector.extract_strided_slice %13 {offsets = [0, 128], sizes = [2, 64], strides = [1, 1]} : vector<2x192xf32> to vector<2x64xf32>
    %22 = math.tanh %20 : vector<2x64xf32>
    %23 = arith.mulf %21, %22 : vector<2x64xf32>
    %24 = vector.extract_strided_slice %23 {offsets = [0, 0], sizes = [2, 32], strides = [1, 1]} : vector<2x64xf32> to vector<2x32xf32>
    %25 = arith.index_cast %c0_i32 : i32 to index
    %c0_5 = arith.constant 0 : index
    %c0_6 = arith.constant 0 : index
    %26 = vector.load %arg4[%25, %c0_5, %c0_6] : memref<8x2x64xf32, #tpu.memory_space<vmem>>, vector<1x2x32xf32>
    %27 = vector.shape_cast %26 : vector<1x2x32xf32> to vector<2x32xf32>
    %28 = vector.shape_cast %24 : vector<2x32xf32> to vector<1x2x32xf32>
    tpu.vector_store %arg4[%25, %c0_5, %c0_6], %28 {strides = array<i32>} : memref<8x2x64xf32, #tpu.memory_space<vmem>>, vector<1x2x32xf32>,
    %29 = vector.extract_strided_slice %23 {offsets = [0, 32], sizes = [2, 32], strides = [1, 1]} : vector<2x64xf32> to vector<2x32xf32>
    %30 = arith.index_cast %2 : i32 to index
    %c0_7 = arith.constant 0 : index
    %c32 = arith.constant 32 : index
    %31 = vector.load %arg4[%30, %c0_7, %c32] : memref<8x2x64xf32, #tpu.memory_space<vmem>>, vector<1x2x32xf32>
    %32 = vector.shape_cast %31 : vector<1x2x32xf32> to vector<2x32xf32>
    %33 = vector.shape_cast %29 : vector<2x32xf32> to vector<1x2x32xf32>
    tpu.vector_store %arg4[%30, %c0_7, %c32], %33 {strides = array<i32>} : memref<8x2x64xf32, #tpu.memory_space<vmem>>, vector<1x2x32xf32>,
    %c1_i32 = arith.constant 1 : i32
    %c7_i32_8 = arith.constant 7 : i32
    %34 = arith.subi %c7_i32_8, %c1_i32 : i32
    %35 = arith.index_cast %c1_i32 : i32 to index
    %c0_9 = arith.constant 0 : index
    %c0_10 = arith.constant 0 : index
    %36 = vector.load %arg0[%35, %c0_9, %c0_10] : memref<8x2x256xf32, #tpu.memory_space<vmem>>, vector<1x2x256xf32>
    %37 = vector.shape_cast %36 : vector<1x2x256xf32> to vector<2x256xf32>
    %cst_11 = arith.constant dense<0.000000e+00> : vector<2x256xf32>
    %38 = tpu.matmul %23, %0, %cst_11 {dimension_numbers = #tpu.dot_dimension_numbers<[1], [0], [0], [1], [0, 0, 1, 1], [], []>} : vector<2x64xf32>, vector<64x256xf32>, vector<2x256xf32> -> vector<2x256xf32>
    %39 = arith.addf %37, %38 : vector<2x256xf32>
    %40 = vector.extract_strided_slice %39 {offsets = [0, 0], sizes = [2, 192], strides = [1, 1]} : vector<2x256xf32> to vector<2x192xf32>
    %41 = arith.negf %40 : vector<2x192xf32>
    %42 = math.exp %41 : vector<2x192xf32>
    %cst_12 = arith.constant 1.000000e+00 : f32
    %43 = vector.broadcast %cst_12 : f32 to vector<2x192xf32>
    %44 = arith.addf %43, %42 : vector<2x192xf32>
    %45 = arith.divf %43, %44 : vector<2x192xf32>
    %46 = vector.extract_strided_slice %39 {offsets = [0, 192], sizes = [2, 64], strides = [1, 1]} : vector<2x256xf32> to vector<2x64xf32>
    %47 = math.tanh %46 : vector<2x64xf32>
    %48 = vector.extract_strided_slice %45 {offsets = [0, 64], sizes = [2, 64], strides = [1, 1]} : vector<2x192xf32> to vector<2x64xf32>
    %49 = arith.mulf %48, %20 : vector<2x64xf32>
    %50 = vector.extract_strided_slice %45 {offsets = [0, 0], sizes = [2, 64], strides = [1, 1]} : vector<2x192xf32> to vector<2x64xf32>
    %51 = arith.mulf %50, %47 : vector<2x64xf32>
    %52 = arith.addf %49, %51 : vector<2x64xf32>
    %53 = vector.extract_strided_slice %45 {offsets = [0, 128], sizes = [2, 64], strides = [1, 1]} : vector<2x192xf32> to vector<2x64xf32>
    %54 = math.tanh %52 : vector<2x64xf32>
    %55 = arith.mulf %53, %54 : vector<2x64xf32>
    %56 = vector.extract_strided_slice %55 {offsets = [0, 0], sizes = [2, 32], strides = [1, 1]} : vector<2x64xf32> to vector<2x32xf32>
    %57 = arith.index_cast %c1_i32 : i32 to index
    %c0_13 = arith.constant 0 : index
    %c0_14 = arith.constant 0 : index
    %58 = vector.load %arg4[%57, %c0_13, %c0_14] : memref<8x2x64xf32, #tpu.memory_space<vmem>>, vector<1x2x32xf32>
    %59 = vector.shape_cast %58 : vector<1x2x32xf32> to vector<2x32xf32>
    %60 = vector.shape_cast %56 : vector<2x32xf32> to vector<1x2x32xf32>
    tpu.vector_store %arg4[%57, %c0_13, %c0_14], %60 {strides = array<i32>} : memref<8x2x64xf32, #tpu.memory_space<vmem>>, vector<1x2x32xf32>,
    %61 = vector.extract_strided_slice %55 {offsets = [0, 32], sizes = [2, 32], strides = [1, 1]} : vector<2x64xf32> to vector<2x32xf32>
    %62 = arith.index_cast %34 : i32 to index
    %c0_15 = arith.constant 0 : index
    %c32_16 = arith.constant 32 : index
    %63 = vector.load %arg4[%62, %c0_15, %c32_16] : memref<8x2x64xf32, #tpu.memory_space<vmem>>, vector<1x2x32xf32>
    %64 = vector.shape_cast %63 : vector<1x2x32xf32> to vector<2x32xf32>
    %65 = vector.shape_cast %61 : vector<2x32xf32> to vector<1x2x32xf32>
    tpu.vector_store %arg4[%62, %c0_15, %c32_16], %65 {strides = array<i32>} : memref<8x2x64xf32, #tpu.memory_space<vmem>>, vector<1x2x32xf32>,
    %c2_i32 = arith.constant 2 : i32
    %c7_i32_17 = arith.constant 7 : i32
    %66 = arith.subi %c7_i32_17, %c2_i32 : i32
    %67 = arith.index_cast %c2_i32 : i32 to index
    %c0_18 = arith.constant 0 : index
    %c0_19 = arith.constant 0 : index
    %68 = vector.load %arg0[%67, %c0_18, %c0_19] : memref<8x2x256xf32, #tpu.memory_space<vmem>>, vector<1x2x256xf32>
    %69 = vector.shape_cast %68 : vector<1x2x256xf32> to vector<2x256xf32>
    %cst_20 = arith.constant dense<0.000000e+00> : vector<2x256xf32>
    %70 = tpu.matmul %55, %0, %cst_20 {dimension_numbers = #tpu.dot_dimension_numbers<[1], [0], [0], [1], [0, 0, 1, 1], [], []>} : vector<2x64xf32>, vector<64x256xf32>, vector<2x256xf32> -> vector<2x256xf32>
    %71 = arith.addf %69, %70 : vector<2x256xf32>
    %72 = vector.extract_strided_slice %71 {offsets = [0, 0], sizes = [2, 192], strides = [1, 1]} : vector<2x256xf32> to vector<2x192xf32>
    %73 = arith.negf %72 : vector<2x192xf32>
    %74 = math.exp %73 : vector<2x192xf32>
    %cst_21 = arith.constant 1.000000e+00 : f32
    %75 = vector.broadcast %cst_21 : f32 to vector<2x192xf32>
    %76 = arith.addf %75, %74 : vector<2x192xf32>
    %77 = arith.divf %75, %76 : vector<2x192xf32>
    %78 = vector.extract_strided_slice %71 {offsets = [0, 192], sizes = [2, 64], strides = [1, 1]} : vector<2x256xf32> to vector<2x64xf32>
    %79 = math.tanh %78 : vector<2x64xf32>
    %80 = vector.extract_strided_slice %77 {offsets = [0, 64], sizes = [2, 64], strides = [1, 1]} : vector<2x192xf32> to vector<2x64xf32>
    %81 = arith.mulf %80, %52 : vector<2x64xf32>
    %82 = vector.extract_strided_slice %77 {offsets = [0, 0], sizes = [2, 64], strides = [1, 1]} : vector<2x192xf32> to vector<2x64xf32>
    %83 = arith.mulf %82, %79 : vector<2x64xf32>
    %84 = arith.addf %81, %83 : vector<2x64xf32>
    %85 = vector.extract_strided_slice %77 {offsets = [0, 128], sizes = [2, 64], strides = [1, 1]} : vector<2x192xf32> to vector<2x64xf32>
    %86 = math.tanh %84 : vector<2x64xf32>
    %87 = arith.mulf %85, %86 : vector<2x64xf32>
    %88 = vector.extract_strided_slice %87 {offsets = [0, 0], sizes = [2, 32], strides = [1, 1]} : vector<2x64xf32> to vector<2x32xf32>
    %89 = arith.index_cast %c2_i32 : i32 to index
    %c0_22 = arith.constant 0 : index
    %c0_23 = arith.constant 0 : index
    %90 = vector.load %arg4[%89, %c0_22, %c0_23] : memref<8x2x64xf32, #tpu.memory_space<vmem>>, vector<1x2x32xf32>
    %91 = vector.shape_cast %90 : vector<1x2x32xf32> to vector<2x32xf32>
    %92 = vector.shape_cast %88 : vector<2x32xf32> to vector<1x2x32xf32>
    tpu.vector_store %arg4[%89, %c0_22, %c0_23], %92 {strides = array<i32>} : memref<8x2x64xf32, #tpu.memory_space<vmem>>, vector<1x2x32xf32>,
    %93 = vector.extract_strided_slice %87 {offsets = [0, 32], sizes = [2, 32], strides = [1, 1]} : vector<2x64xf32> to vector<2x32xf32>
    %94 = arith.index_cast %66 : i32 to index
    %c0_24 = arith.constant 0 : index
    %c32_25 = arith.constant 32 : index
    %95 = vector.load %arg4[%94, %c0_24, %c32_25] : memref<8x2x64xf32, #tpu.memory_space<vmem>>, vector<1x2x32xf32>
    %96 = vector.shape_cast %95 : vector<1x2x32xf32> to vector<2x32xf32>
    %97 = vector.shape_cast %93 : vector<2x32xf32> to vector<1x2x32xf32>
    tpu.vector_store %arg4[%94, %c0_24, %c32_25], %97 {strides = array<i32>} : memref<8x2x64xf32, #tpu.memory_space<vmem>>, vector<1x2x32xf32>,
    %c3_i32 = arith.constant 3 : i32
    %c7_i32_26 = arith.constant 7 : i32
    %98 = arith.subi %c7_i32_26, %c3_i32 : i32
    %99 = arith.index_cast %c3_i32 : i32 to index
    %c0_27 = arith.constant 0 : index
    %c0_28 = arith.constant 0 : index
    %100 = vector.load %arg0[%99, %c0_27, %c0_28] : memref<8x2x256xf32, #tpu.memory_space<vmem>>, vector<1x2x256xf32>
    %101 = vector.shape_cast %100 : vector<1x2x256xf32> to vector<2x256xf32>
    %cst_29 = arith.constant dense<0.000000e+00> : vector<2x256xf32>
    %102 = tpu.matmul %87, %0, %cst_29 {dimension_numbers = #tpu.dot_dimension_numbers<[1], [0], [0], [1], [0, 0, 1, 1], [], []>} : vector<2x64xf32>, vector<64x256xf32>, vector<2x256xf32> -> vector<2x256xf32>
    %103 = arith.addf %101, %102 : vector<2x256xf32>
    %104 = vector.extract_strided_slice %103 {offsets = [0, 0], sizes = [2, 192], strides = [1, 1]} : vector<2x256xf32> to vector<2x192xf32>
    %105 = arith.negf %104 : vector<2x192xf32>
    %106 = math.exp %105 : vector<2x192xf32>
    %cst_30 = arith.constant 1.000000e+00 : f32
    %107 = vector.broadcast %cst_30 : f32 to vector<2x192xf32>
    %108 = arith.addf %107, %106 : vector<2x192xf32>
    %109 = arith.divf %107, %108 : vector<2x192xf32>
    %110 = vector.extract_strided_slice %103 {offsets = [0, 192], sizes = [2, 64], strides = [1, 1]} : vector<2x256xf32> to vector<2x64xf32>
    %111 = math.tanh %110 : vector<2x64xf32>
    %112 = vector.extract_strided_slice %109 {offsets = [0, 64], sizes = [2, 64], strides = [1, 1]} : vector<2x192xf32> to vector<2x64xf32>
    %113 = arith.mulf %112, %84 : vector<2x64xf32>
    %114 = vector.extract_strided_slice %109 {offsets = [0, 0], sizes = [2, 64], strides = [1, 1]} : vector<2x192xf32> to vector<2x64xf32>
    %115 = arith.mulf %114, %111 : vector<2x64xf32>
    %116 = arith.addf %113, %115 : vector<2x64xf32>
    %117 = vector.extract_strided_slice %109 {offsets = [0, 128], sizes = [2, 64], strides = [1, 1]} : vector<2x192xf32> to vector<2x64xf32>
    %118 = math.tanh %116 : vector<2x64xf32>
    %119 = arith.mulf %117, %118 : vector<2x64xf32>
    %120 = vector.extract_strided_slice %119 {offsets = [0, 0], sizes = [2, 32], strides = [1, 1]} : vector<2x64xf32> to vector<2x32xf32>
    %121 = arith.index_cast %c3_i32 : i32 to index
    %c0_31 = arith.constant 0 : index
    %c0_32 = arith.constant 0 : index
    %122 = vector.load %arg4[%121, %c0_31, %c0_32] : memref<8x2x64xf32, #tpu.memory_space<vmem>>, vector<1x2x32xf32>
    %123 = vector.shape_cast %122 : vector<1x2x32xf32> to vector<2x32xf32>
    %124 = vector.shape_cast %120 : vector<2x32xf32> to vector<1x2x32xf32>
    tpu.vector_store %arg4[%121, %c0_31, %c0_32], %124 {strides = array<i32>} : memref<8x2x64xf32, #tpu.memory_space<vmem>>, vector<1x2x32xf32>,
    %125 = vector.extract_strided_slice %119 {offsets = [0, 32], sizes = [2, 32], strides = [1, 1]} : vector<2x64xf32> to vector<2x32xf32>
    %126 = arith.index_cast %98 : i32 to index
    %c0_33 = arith.constant 0 : index
    %c32_34 = arith.constant 32 : index
    %127 = vector.load %arg4[%126, %c0_33, %c32_34] : memref<8x2x64xf32, #tpu.memory_space<vmem>>, vector<1x2x32xf32>
    %128 = vector.shape_cast %127 : vector<1x2x32xf32> to vector<2x32xf32>
    %129 = vector.shape_cast %125 : vector<2x32xf32> to vector<1x2x32xf32>
    tpu.vector_store %arg4[%126, %c0_33, %c32_34], %129 {strides = array<i32>} : memref<8x2x64xf32, #tpu.memory_space<vmem>>, vector<1x2x32xf32>,
    %c4_i32 = arith.constant 4 : i32
    %c7_i32_35 = arith.constant 7 : i32
    %130 = arith.subi %c7_i32_35, %c4_i32 : i32
    %131 = arith.index_cast %c4_i32 : i32 to index
    %c0_36 = arith.constant 0 : index
    %c0_37 = arith.constant 0 : index
    %132 = vector.load %arg0[%131, %c0_36, %c0_37] : memref<8x2x256xf32, #tpu.memory_space<vmem>>, vector<1x2x256xf32>
    %133 = vector.shape_cast %132 : vector<1x2x256xf32> to vector<2x256xf32>
    %cst_38 = arith.constant dense<0.000000e+00> : vector<2x256xf32>
    %134 = tpu.matmul %119, %0, %cst_38 {dimension_numbers = #tpu.dot_dimension_numbers<[1], [0], [0], [1], [0, 0, 1, 1], [], []>} : vector<2x64xf32>, vector<64x256xf32>, vector<2x256xf32> -> vector<2x256xf32>
    %135 = arith.addf %133, %134 : vector<2x256xf32>
    %136 = vector.extract_strided_slice %135 {offsets = [0, 0], sizes = [2, 192], strides = [1, 1]} : vector<2x256xf32> to vector<2x192xf32>
    %137 = arith.negf %136 : vector<2x192xf32>
    %138 = math.exp %137 : vector<2x192xf32>
    %cst_39 = arith.constant 1.000000e+00 : f32
    %139 = vector.broadcast %cst_39 : f32 to vector<2x192xf32>
    %140 = arith.addf %139, %138 : vector<2x192xf32>
    %141 = arith.divf %139, %140 : vector<2x192xf32>
    %142 = vector.extract_strided_slice %135 {offsets = [0, 192], sizes = [2, 64], strides = [1, 1]} : vector<2x256xf32> to vector<2x64xf32>
    %143 = math.tanh %142 : vector<2x64xf32>
    %144 = vector.extract_strided_slice %141 {offsets = [0, 64], sizes = [2, 64], strides = [1, 1]} : vector<2x192xf32> to vector<2x64xf32>
    %145 = arith.mulf %144, %116 : vector<2x64xf32>
    %146 = vector.extract_strided_slice %141 {offsets = [0, 0], sizes = [2, 64], strides = [1, 1]} : vector<2x192xf32> to vector<2x64xf32>
    %147 = arith.mulf %146, %143 : vector<2x64xf32>
    %148 = arith.addf %145, %147 : vector<2x64xf32>
    %149 = vector.extract_strided_slice %141 {offsets = [0, 128], sizes = [2, 64], strides = [1, 1]} : vector<2x192xf32> to vector<2x64xf32>
    %150 = math.tanh %148 : vector<2x64xf32>
    %151 = arith.mulf %149, %150 : vector<2x64xf32>
    %152 = vector.extract_strided_slice %151 {offsets = [0, 0], sizes = [2, 32], strides = [1, 1]} : vector<2x64xf32> to vector<2x32xf32>
    %153 = arith.index_cast %c4_i32 : i32 to index
    %c0_40 = arith.constant 0 : index
    %c0_41 = arith.constant 0 : index
    %154 = vector.load %arg4[%153, %c0_40, %c0_41] : memref<8x2x64xf32, #tpu.memory_space<vmem>>, vector<1x2x32xf32>
    %155 = vector.shape_cast %154 : vector<1x2x32xf32> to vector<2x32xf32>
    %156 = vector.shape_cast %152 : vector<2x32xf32> to vector<1x2x32xf32>
    tpu.vector_store %arg4[%153, %c0_40, %c0_41], %156 {strides = array<i32>} : memref<8x2x64xf32, #tpu.memory_space<vmem>>, vector<1x2x32xf32>,
    %157 = vector.extract_strided_slice %151 {offsets = [0, 32], sizes = [2, 32], strides = [1, 1]} : vector<2x64xf32> to vector<2x32xf32>
    %158 = arith.index_cast %130 : i32 to index
    %c0_42 = arith.constant 0 : index
    %c32_43 = arith.constant 32 : index
    %159 = vector.load %arg4[%158, %c0_42, %c32_43] : memref<8x2x64xf32, #tpu.memory_space<vmem>>, vector<1x2x32xf32>
    %160 = vector.shape_cast %159 : vector<1x2x32xf32> to vector<2x32xf32>
    %161 = vector.shape_cast %157 : vector<2x32xf32> to vector<1x2x32xf32>
    tpu.vector_store %arg4[%158, %c0_42, %c32_43], %161 {strides = array<i32>} : memref<8x2x64xf32, #tpu.memory_space<vmem>>, vector<1x2x32xf32>,
    %c5_i32 = arith.constant 5 : i32
    %c7_i32_44 = arith.constant 7 : i32
    %162 = arith.subi %c7_i32_44, %c5_i32 : i32
    %163 = arith.index_cast %c5_i32 : i32 to index
    %c0_45 = arith.constant 0 : index
    %c0_46 = arith.constant 0 : index
    %164 = vector.load %arg0[%163, %c0_45, %c0_46] : memref<8x2x256xf32, #tpu.memory_space<vmem>>, vector<1x2x256xf32>
    %165 = vector.shape_cast %164 : vector<1x2x256xf32> to vector<2x256xf32>
    %cst_47 = arith.constant dense<0.000000e+00> : vector<2x256xf32>
    %166 = tpu.matmul %151, %0, %cst_47 {dimension_numbers = #tpu.dot_dimension_numbers<[1], [0], [0], [1], [0, 0, 1, 1], [], []>} : vector<2x64xf32>, vector<64x256xf32>, vector<2x256xf32> -> vector<2x256xf32>
    %167 = arith.addf %165, %166 : vector<2x256xf32>
    %168 = vector.extract_strided_slice %167 {offsets = [0, 0], sizes = [2, 192], strides = [1, 1]} : vector<2x256xf32> to vector<2x192xf32>
    %169 = arith.negf %168 : vector<2x192xf32>
    %170 = math.exp %169 : vector<2x192xf32>
    %cst_48 = arith.constant 1.000000e+00 : f32
    %171 = vector.broadcast %cst_48 : f32 to vector<2x192xf32>
    %172 = arith.addf %171, %170 : vector<2x192xf32>
    %173 = arith.divf %171, %172 : vector<2x192xf32>
    %174 = vector.extract_strided_slice %167 {offsets = [0, 192], sizes = [2, 64], strides = [1, 1]} : vector<2x256xf32> to vector<2x64xf32>
    %175 = math.tanh %174 : vector<2x64xf32>
    %176 = vector.extract_strided_slice %173 {offsets = [0, 64], sizes = [2, 64], strides = [1, 1]} : vector<2x192xf32> to vector<2x64xf32>
    %177 = arith.mulf %176, %148 : vector<2x64xf32>
    %178 = vector.extract_strided_slice %173 {offsets = [0, 0], sizes = [2, 64], strides = [1, 1]} : vector<2x192xf32> to vector<2x64xf32>
    %179 = arith.mulf %178, %175 : vector<2x64xf32>
    %180 = arith.addf %177, %179 : vector<2x64xf32>
    %181 = vector.extract_strided_slice %173 {offsets = [0, 128], sizes = [2, 64], strides = [1, 1]} : vector<2x192xf32> to vector<2x64xf32>
    %182 = math.tanh %180 : vector<2x64xf32>
    %183 = arith.mulf %181, %182 : vector<2x64xf32>
    %184 = vector.extract_strided_slice %183 {offsets = [0, 0], sizes = [2, 32], strides = [1, 1]} : vector<2x64xf32> to vector<2x32xf32>
    %185 = arith.index_cast %c5_i32 : i32 to index
    %c0_49 = arith.constant 0 : index
    %c0_50 = arith.constant 0 : index
    %186 = vector.load %arg4[%185, %c0_49, %c0_50] : memref<8x2x64xf32, #tpu.memory_space<vmem>>, vector<1x2x32xf32>
    %187 = vector.shape_cast %186 : vector<1x2x32xf32> to vector<2x32xf32>
    %188 = vector.shape_cast %184 : vector<2x32xf32> to vector<1x2x32xf32>
    tpu.vector_store %arg4[%185, %c0_49, %c0_50], %188 {strides = array<i32>} : memref<8x2x64xf32, #tpu.memory_space<vmem>>, vector<1x2x32xf32>,
    %189 = vector.extract_strided_slice %183 {offsets = [0, 32], sizes = [2, 32], strides = [1, 1]} : vector<2x64xf32> to vector<2x32xf32>
    %190 = arith.index_cast %162 : i32 to index
    %c0_51 = arith.constant 0 : index
    %c32_52 = arith.constant 32 : index
    %191 = vector.load %arg4[%190, %c0_51, %c32_52] : memref<8x2x64xf32, #tpu.memory_space<vmem>>, vector<1x2x32xf32>
    %192 = vector.shape_cast %191 : vector<1x2x32xf32> to vector<2x32xf32>
    %193 = vector.shape_cast %189 : vector<2x32xf32> to vector<1x2x32xf32>
    tpu.vector_store %arg4[%190, %c0_51, %c32_52], %193 {strides = array<i32>} : memref<8x2x64xf32, #tpu.memory_space<vmem>>, vector<1x2x32xf32>,
    %c6_i32 = arith.constant 6 : i32
    %c7_i32_53 = arith.constant 7 : i32
    %194 = arith.subi %c7_i32_53, %c6_i32 : i32
    %195 = arith.index_cast %c6_i32 : i32 to index
    %c0_54 = arith.constant 0 : index
    %c0_55 = arith.constant 0 : index
    %196 = vector.load %arg0[%195, %c0_54, %c0_55] : memref<8x2x256xf32, #tpu.memory_space<vmem>>, vector<1x2x256xf32>
    %197 = vector.shape_cast %196 : vector<1x2x256xf32> to vector<2x256xf32>
    %cst_56 = arith.constant dense<0.000000e+00> : vector<2x256xf32>
    %198 = tpu.matmul %183, %0, %cst_56 {dimension_numbers = #tpu.dot_dimension_numbers<[1], [0], [0], [1], [0, 0, 1, 1], [], []>} : vector<2x64xf32>, vector<64x256xf32>, vector<2x256xf32> -> vector<2x256xf32>
    %199 = arith.addf %197, %198 : vector<2x256xf32>
    %200 = vector.extract_strided_slice %199 {offsets = [0, 0], sizes = [2, 192], strides = [1, 1]} : vector<2x256xf32> to vector<2x192xf32>
    %201 = arith.negf %200 : vector<2x192xf32>
    %202 = math.exp %201 : vector<2x192xf32>
    %cst_57 = arith.constant 1.000000e+00 : f32
    %203 = vector.broadcast %cst_57 : f32 to vector<2x192xf32>
    %204 = arith.addf %203, %202 : vector<2x192xf32>
    %205 = arith.divf %203, %204 : vector<2x192xf32>
    %206 = vector.extract_strided_slice %199 {offsets = [0, 192], sizes = [2, 64], strides = [1, 1]} : vector<2x256xf32> to vector<2x64xf32>
    %207 = math.tanh %206 : vector<2x64xf32>
    %208 = vector.extract_strided_slice %205 {offsets = [0, 64], sizes = [2, 64], strides = [1, 1]} : vector<2x192xf32> to vector<2x64xf32>
    %209 = arith.mulf %208, %180 : vector<2x64xf32>
    %210 = vector.extract_strided_slice %205 {offsets = [0, 0], sizes = [2, 64], strides = [1, 1]} : vector<2x192xf32> to vector<2x64xf32>
    %211 = arith.mulf %210, %207 : vector<2x64xf32>
    %212 = arith.addf %209, %211 : vector<2x64xf32>
    %213 = vector.extract_strided_slice %205 {offsets = [0, 128], sizes = [2, 64], strides = [1, 1]} : vector<2x192xf32> to vector<2x64xf32>
    %214 = math.tanh %212 : vector<2x64xf32>
    %215 = arith.mulf %213, %214 : vector<2x64xf32>
    %216 = vector.extract_strided_slice %215 {offsets = [0, 0], sizes = [2, 32], strides = [1, 1]} : vector<2x64xf32> to vector<2x32xf32>
    %217 = arith.index_cast %c6_i32 : i32 to index
    %c0_58 = arith.constant 0 : index
    %c0_59 = arith.constant 0 : index
    %218 = vector.load %arg4[%217, %c0_58, %c0_59] : memref<8x2x64xf32, #tpu.memory_space<vmem>>, vector<1x2x32xf32>
    %219 = vector.shape_cast %218 : vector<1x2x32xf32> to vector<2x32xf32>
    %220 = vector.shape_cast %216 : vector<2x32xf32> to vector<1x2x32xf32>
    tpu.vector_store %arg4[%217, %c0_58, %c0_59], %220 {strides = array<i32>} : memref<8x2x64xf32, #tpu.memory_space<vmem>>, vector<1x2x32xf32>,
    %221 = vector.extract_strided_slice %215 {offsets = [0, 32], sizes = [2, 32], strides = [1, 1]} : vector<2x64xf32> to vector<2x32xf32>
    %222 = arith.index_cast %194 : i32 to index
    %c0_60 = arith.constant 0 : index
    %c32_61 = arith.constant 32 : index
    %223 = vector.load %arg4[%222, %c0_60, %c32_61] : memref<8x2x64xf32, #tpu.memory_space<vmem>>, vector<1x2x32xf32>
    %224 = vector.shape_cast %223 : vector<1x2x32xf32> to vector<2x32xf32>
    %225 = vector.shape_cast %221 : vector<2x32xf32> to vector<1x2x32xf32>
    tpu.vector_store %arg4[%222, %c0_60, %c32_61], %225 {strides = array<i32>} : memref<8x2x64xf32, #tpu.memory_space<vmem>>, vector<1x2x32xf32>,
    %c7_i32_62 = arith.constant 7 : i32
    %c7_i32_63 = arith.constant 7 : i32
    %226 = arith.subi %c7_i32_63, %c7_i32_62 : i32
    %227 = arith.index_cast %c7_i32_62 : i32 to index
    %c0_64 = arith.constant 0 : index
    %c0_65 = arith.constant 0 : index
    %228 = vector.load %arg0[%227, %c0_64, %c0_65] : memref<8x2x256xf32, #tpu.memory_space<vmem>>, vector<1x2x256xf32>
    %229 = vector.shape_cast %228 : vector<1x2x256xf32> to vector<2x256xf32>
    %cst_66 = arith.constant dense<0.000000e+00> : vector<2x256xf32>
    %230 = tpu.matmul %215, %0, %cst_66 {dimension_numbers = #tpu.dot_dimension_numbers<[1], [0], [0], [1], [0, 0, 1, 1], [], []>} : vector<2x64xf32>, vector<64x256xf32>, vector<2x256xf32> -> vector<2x256xf32>
    %231 = arith.addf %229, %230 : vector<2x256xf32>
    %232 = vector.extract_strided_slice %231 {offsets = [0, 0], sizes = [2, 192], strides = [1, 1]} : vector<2x256xf32> to vector<2x192xf32>
    %233 = arith.negf %232 : vector<2x192xf32>
    %234 = math.exp %233 : vector<2x192xf32>
    %cst_67 = arith.constant 1.000000e+00 : f32
    %235 = vector.broadcast %cst_67 : f32 to vector<2x192xf32>
    %236 = arith.addf %235, %234 : vector<2x192xf32>
    %237 = arith.divf %235, %236 : vector<2x192xf32>
    %238 = vector.extract_strided_slice %231 {offsets = [0, 192], sizes = [2, 64], strides = [1, 1]} : vector<2x256xf32> to vector<2x64xf32>
    %239 = math.tanh %238 : vector<2x64xf32>
    %240 = vector.extract_strided_slice %237 {offsets = [0, 64], sizes = [2, 64], strides = [1, 1]} : vector<2x192xf32> to vector<2x64xf32>
    %241 = arith.mulf %240, %212 : vector<2x64xf32>
    %242 = vector.extract_strided_slice %237 {offsets = [0, 0], sizes = [2, 64], strides = [1, 1]} : vector<2x192xf32> to vector<2x64xf32>
    %243 = arith.mulf %242, %239 : vector<2x64xf32>
    %244 = arith.addf %241, %243 : vector<2x64xf32>
    %245 = vector.extract_strided_slice %237 {offsets = [0, 128], sizes = [2, 64], strides = [1, 1]} : vector<2x192xf32> to vector<2x64xf32>
    %246 = math.tanh %244 : vector<2x64xf32>
    %247 = arith.mulf %245, %246 : vector<2x64xf32>
    %248 = vector.extract_strided_slice %247 {offsets = [0, 0], sizes = [2, 32], strides = [1, 1]} : vector<2x64xf32> to vector<2x32xf32>
    %249 = arith.index_cast %c7_i32_62 : i32 to index
    %c0_68 = arith.constant 0 : index
    %c0_69 = arith.constant 0 : index
    %250 = vector.load %arg4[%249, %c0_68, %c0_69] : memref<8x2x64xf32, #tpu.memory_space<vmem>>, vector<1x2x32xf32>
    %251 = vector.shape_cast %250 : vector<1x2x32xf32> to vector<2x32xf32>
    %252 = vector.shape_cast %248 : vector<2x32xf32> to vector<1x2x32xf32>
    tpu.vector_store %arg4[%249, %c0_68, %c0_69], %252 {strides = array<i32>} : memref<8x2x64xf32, #tpu.memory_space<vmem>>, vector<1x2x32xf32>,
    %253 = vector.extract_strided_slice %247 {offsets = [0, 32], sizes = [2, 32], strides = [1, 1]} : vector<2x64xf32> to vector<2x32xf32>
    %254 = arith.index_cast %226 : i32 to index
    %c0_70 = arith.constant 0 : index
    %c32_71 = arith.constant 32 : index
    %255 = vector.load %arg4[%254, %c0_70, %c32_71] : memref<8x2x64xf32, #tpu.memory_space<vmem>>, vector<1x2x32xf32>
    %256 = vector.shape_cast %255 : vector<1x2x32xf32> to vector<2x32xf32>
    %257 = vector.shape_cast %253 : vector<2x32xf32> to vector<1x2x32xf32>
    tpu.vector_store %arg4[%254, %c0_70, %c32_71], %257 {strides = array<i32>} : memref<8x2x64xf32, #tpu.memory_space<vmem>>, vector<1x2x32xf32>,
    %c8_i32 = arith.constant 8 : i32
    %258 = tpu.concatenate %247, %244 in 1 : vector<2x64xf32>, vector<2x64xf32> -> vector<2x128xf32>
    %c0_72 = arith.constant 0 : index
    %c0_73 = arith.constant 0 : index
    %259 = vector.load %arg2[%c0_72, %c0_73] : memref<128x64xf32, #tpu.memory_space<vmem>>, vector<128x64xf32>
    %cst_74 = arith.constant dense<0.000000e+00> : vector<2x64xf32>
    %260 = tpu.matmul %258, %259, %cst_74 {dimension_numbers = #tpu.dot_dimension_numbers<[1], [0], [0], [1], [0, 0, 1, 1], [], []>} : vector<2x128xf32>, vector<128x64xf32>, vector<2x64xf32> -> vector<2x64xf32>
    %c0_75 = arith.constant 0 : index
    %c0_76 = arith.constant 0 : index
    %261 = vector.load %arg3[%c0_75, %c0_76] : memref<1x64xf32, #tpu.memory_space<vmem>>, vector<1x64xf32>
    %262 = vector.broadcast %261 : vector<1x64xf32> to vector<2x64xf32>
    %263 = arith.addf %260, %262 : vector<2x64xf32>
    %c0_77 = arith.constant 0 : index
    %c0_78 = arith.constant 0 : index
    %264 = vector.load %arg5[%c0_77, %c0_78] : memref<2x64xf32, #tpu.memory_space<vmem>>, vector<2x64xf32>
    tpu.vector_store %arg5[%c0_77, %c0_78], %263 {strides = array<i32>} : memref<2x64xf32, #tpu.memory_space<vmem>>, vector<2x64xf32>,
    return
  }
}

</mosaic_0001>

<llo_original>
// kernel: lstm_encoder_forward.1
$region0: #{lstm_encoder_forward.1}
  #allocation0 [shape = 'u32[]', space=smem, size = 0x4, offset = 0x4, fixed_abs, tag = 'smem constant byte address 0x4 - core index']
  #allocation1 [shape = 'u32[144,128]{1,0:T(1,128)}', space=vmem, size = 0x12000, scoped, tag = 'internal scratch']
  %s0 = inlined_call_operand.vmem [shape: f32[8,2,256], index: 0, kind: input, shape index: {}]
  %s1 = inlined_call_operand.vmem [shape: f32[64,256], index: 1, kind: input, shape index: {}]
  %s2 = inlined_call_operand.vmem [shape: f32[128,64], index: 2, kind: input, shape index: {}]
  %s3 = inlined_call_operand.vmem [shape: f32[1,64], index: 3, kind: input, shape index: {}]
  %s4 = inlined_call_operand.vmem [shape: f32[8,2,64], index: 4, kind: output, shape index: {0}]
  %s5 = inlined_call_operand.vmem [shape: f32[2,64], index: 5, kind: output, shape index: {1}]
  %6 = xla_tuple %s4, %s5
  %s7 = sld [smem:[#allocation0]]
  $region34: #{lstm_encoder_forward.1} parent=0
    _
  %s9 = ssub.s32 1, %s7
  %s10 = scalar_select 0, %s9, %s7
  // Predicated region
  $region2: #{lstm_encoder_forward.1} parent=0 // pred_check
    _
  $region3: #{lstm_encoder_forward.1} parent=0 // pred_check_branch
    %12 = sbr.rel (0) target = $region5
  $region4: #{lstm_encoder_forward.1} parent=0 // pred_region
    _
  $region5: #{lstm_encoder_forward.1} parent=0 // pred_fallthru
    _
  // Predicated region
  $region6: #{lstm_encoder_forward.1} parent=0 // pred_check
    _
  $region7: #{lstm_encoder_forward.1} parent=0 // pred_check_branch
    %14 = sbr.rel (0) target = $region9
  $region8: #{lstm_encoder_forward.1} parent=0 // pred_region
    _
  $region9: #{lstm_encoder_forward.1} parent=0 // pred_fallthru
    _
  // Predicated region
  $region10: #{lstm_encoder_forward.1} parent=0 // pred_check
    _
  $region11: #{lstm_encoder_forward.1} parent=0 // pred_check_branch
    %16 = sbr.rel (0) target = $region13
  $region12: #{lstm_encoder_forward.1} parent=0 // pred_region
    _
  $region13: #{lstm_encoder_forward.1} parent=0 // pred_fallthru
    _
  // Predicated region
  $region14: #{lstm_encoder_forward.1} parent=0 // pred_check
    _
  $region15: #{lstm_encoder_forward.1} parent=0 // pred_check_branch
    %18 = sbr.rel (0) target = $region17
  $region16: #{lstm_encoder_forward.1} parent=0 // pred_region
    _
  $region17: #{lstm_encoder_forward.1} parent=0 // pred_fallthru
    _
  %v19 = vld [vmem:[%s1] sm:$0xff]
  %v20 = vld [vmem:[%s1 + $0x8] sm:$0xff]
  %v21 = vld [vmem:[%s1 + $0x10] sm:$0xff]
  %v22 = vld [vmem:[%s1 + $0x18] sm:$0xff]
  %v23 = vld [vmem:[%s1 + $0x20] sm:$0xff]
  %v24 = vld [vmem:[%s1 + $0x28] sm:$0xff]
  %v25 = vld [vmem:[%s1 + $0x30] sm:$0xff]
  %v26 = vld [vmem:[%s1 + $0x38] sm:$0xff]
  %v27 = vld [vmem:[%s1 + $0x40] sm:$0xff]
  %v28 = vld [vmem:[%s1 + $0x48] sm:$0xff]
  %v29 = vld [vmem:[%s1 + $0x50] sm:$0xff]
  %v30 = vld [vmem:[%s1 + $0x58] sm:$0xff]
  %v31 = vld [vmem:[%s1 + $0x60] sm:$0xff]
  %v32 = vld [vmem:[%s1 + $0x68] sm:$0xff]
  %v33 = vld [vmem:[%s1 + $0x70] sm:$0xff]
  %v34 = vld [vmem:[%s1 + $0x78] sm:$0xff]
  %v35 = vld [vmem:[%s0] sm:$0xf]
  %vm36 = vcmask 523264
  %v38 = vsel %vm36, 0.0, 0
  %40 = vmatprep.subr.mxu0 %v20
  %41 = vmatpush1.msra.mxu0 %v19
  %42 = vmatprep.subr.mxu0 %v22
  %43 = vmatpush1.msra.mxu0 %v21
  %44 = vmatprep.subr.mxu0 %v24
  %45 = vmatpush1.msra.mxu0 %v23
  %46 = vmatprep.subr.mxu0 %v26
  %47 = vmatpush1.msra.mxu0 %v25
  %48 = vmatprep.subr.mxu0 %v28
  %49 = vmatpush1.msra.mxu0 %v27
  %50 = vmatprep.subr.mxu0 %v30
  %51 = vmatpush1.msra.mxu0 %v29
  %52 = vmatprep.subr.mxu0 %v32
  %53 = vmatpush1.msra.mxu0 %v31
  %54 = vmatprep.subr.mxu0 %v34
  %55 = vmatpush1.msra.mxu0 %v33
  %56 = vmatprep.subr.mxu0 0.0
  %57 = vmatpush1.msra.mxu0 0.0
  %58 = vmatprep.subr.mxu0 0.0
  %59 = vmatpush1.msra.mxu0 0.0
  %60 = vmatprep.subr.mxu0 0.0
  %61 = vmatpush1.msra.mxu0 0.0
  %62 = vmatprep.subr.mxu0 0.0
  %63 = vmatpush1.msra.mxu0 0.0
  %64 = vmatprep.subr.mxu0 0.0
  %65 = vmatpush1.msra.mxu0 0.0
  %66 = vmatprep.subr.mxu0 0.0
  %67 = vmatpush1.msra.mxu0 0.0
  %68 = vmatprep.subr.mxu0 0.0
  %69 = vmatpush1.msra.mxu0 0.0
  %70 = vmatprep.subr.mxu0 0.0
  %71 = vmatpush1.msra.mxu0 0.0
  %72 = vmatprep.subr.mxu0 0.0
  %73 = vmatpush1.msra.mxu0 0.0
  %74 = vmatprep.subr.mxu0 0.0
  %75 = vmatpush1.msra.mxu0 0.0
  %76 = vmatprep.subr.mxu0 0.0
  %77 = vmatpush1.msra.mxu0 0.0
  %78 = vmatprep.subr.mxu0 0.0
  %79 = vmatpush1.msra.mxu0 0.0
  %80 = vmatprep.subr.mxu0 0.0
  %81 = vmatpush1.msra.mxu0 0.0
  %82 = vmatprep.subr.mxu0 0.0
  %83 = vmatpush1.msra.mxu0 0.0
  %84 = vmatprep.subr.mxu0 0.0
  %85 = vmatpush1.msra.mxu0 0.0
  %86 = vmatprep.subr.mxu0 0.0
  %87 = vmatpush1.msra.mxu0 0.0
  %88 = vmatprep.subr.mxu0 0.0
  %89 = vmatpush1.msra.mxu0 0.0
  %90 = vmatprep.subr.mxu0 0.0
  %91 = vmatpush1.msra.mxu0 0.0
  %92 = vmatprep.subr.mxu0 0.0
  %93 = vmatpush1.msra.mxu0 0.0
  %94 = vmatprep.subr.mxu0 0.0
  %95 = vmatpush1.msra.mxu0 0.0
  %96 = vmatprep.subr.mxu0 0.0
  %97 = vmatpush1.msra.mxu0 0.0
  %98 = vmatprep.subr.mxu0 0.0
  %99 = vmatpush1.msra.mxu0 0.0
  %100 = vmatprep.subr.mxu0 0.0
  %101 = vmatpush1.msra.mxu0 0.0
  %102 = vmatprep.subr.mxu0 0.0
  %103 = vmatpush1.msra.mxu0 0.0
  %104 = vmatprep.mubr.f32.mxu0 0.0
  %105 = vmatmul.mubr.f32.gmra.mrb[0].mxu0 %v38
  %v106 = vpop.f32.mrb[0].mxu0
  %v107 = vadd.f32 0.0, %v106
  %v108 = vpop.f32.mrb[0].mxu0
  %v109 = vadd.f32 0.0, %v108
  %110 = vdwg.mxu0
  %v113 = vcombine.low %v107, %v109
  %v115 = vunpack.c.l.s4 1983009808
  %v116 = vunpack.c.0.s8 %v115
  %v117 = vlaneseq
  %v118 = vshrl.u32 %v117, 7
  %v119 = vsub.s32 %v116, %v118
  %v120 = vrot.slane %v113, %v119
  %v122 = vadd.f32 %v35, %v120
  %v123 = vxor.u32 %v122, 2147483648
  %v124 = vmul.f32 %v123, 1.442695
  %v125 = vpow.pop %v124
  %v126 = vadd.f32 %v125, 1.0
  %v127 = vrcp.pop %v126
  %v128 = vmul.f32 1.0, %v127
  %130 = vrot.lane.b32.xlu0 %v122, 64
  %v131 = vpop.permute.xlu0 %130
  %v132 = vrot.slane %v131, 2
  %v134 = vtanh.pop %v132
  %v135 = vmul.f32 %v128, 0.0
  %v136 = vmul.f32 %v128, %v134
  %138 = vrot.lane.b32.xlu0 %v136, 64
  %v139 = vpop.permute.xlu0 %138
  %v141 = vadd.f32 %v135, %v139
  %v142 = vtanh.pop %v141
  %v144 = vrot.slane %v128, 2
  %147 = vrot.lane.b32.xlu0 %v142, 64
  %v148 = vpop.permute.xlu0 %147
  %v150 = vmul.f32 %v144, %v148
  %vm151 = vcmask 254976
  %152 = vst.msk [vmem:[%s4] sm:$0x3] %vm151, %v150
  %s153 = scalar_lea.vmem %s4, 14
  %vm154 = vcmask 517376
  %155 = vst.msk [vmem:[%s153] sm:$0x3] %vm154, %v150
  %s156 = scalar_lea.vmem %s0, 4
  %v157 = vld [vmem:[%s156] sm:$0xf]
  %v159 = vsel %vm36, %v150, 0
  %161 = vmatprep.subr.mxu0 %v20
  %162 = vmatpush1.msra.mxu0 %v19
  %163 = vmatprep.subr.mxu0 %v22
  %164 = vmatpush1.msra.mxu0 %v21
  %165 = vmatprep.subr.mxu0 %v24
  %166 = vmatpush1.msra.mxu0 %v23
  %167 = vmatprep.subr.mxu0 %v26
  %168 = vmatpush1.msra.mxu0 %v25
  %169 = vmatprep.subr.mxu0 %v28
  %170 = vmatpush1.msra.mxu0 %v27
  %171 = vmatprep.subr.mxu0 %v30
  %172 = vmatpush1.msra.mxu0 %v29
  %173 = vmatprep.subr.mxu0 %v32
  %174 = vmatpush1.msra.mxu0 %v31
  %175 = vmatprep.subr.mxu0 %v34
  %176 = vmatpush1.msra.mxu0 %v33
  %177 = vmatprep.subr.mxu0 0.0
  %178 = vmatpush1.msra.mxu0 0.0
  %179 = vmatprep.subr.mxu0 0.0
  %180 = vmatpush1.msra.mxu0 0.0
  %181 = vmatprep.subr.mxu0 0.0
  %182 = vmatpush1.msra.mxu0 0.0
  %183 = vmatprep.subr.mxu0 0.0
  %184 = vmatpush1.msra.mxu0 0.0
  %185 = vmatprep.subr.mxu0 0.0
  %186 = vmatpush1.msra.mxu0 0.0
  %187 = vmatprep.subr.mxu0 0.0
  %188 = vmatpush1.msra.mxu0 0.0
  %189 = vmatprep.subr.mxu0 0.0
  %190 = vmatpush1.msra.mxu0 0.0
  %191 = vmatprep.subr.mxu0 0.0
  %192 = vmatpush1.msra.mxu0 0.0
  %193 = vmatprep.subr.mxu0 0.0
  %194 = vmatpush1.msra.mxu0 0.0
  %195 = vmatprep.subr.mxu0 0.0
  %196 = vmatpush1.msra.mxu0 0.0
  %197 = vmatprep.subr.mxu0 0.0
  %198 = vmatpush1.msra.mxu0 0.0
  %199 = vmatprep.subr.mxu0 0.0
  %200 = vmatpush1.msra.mxu0 0.0
  %201 = vmatprep.subr.mxu0 0.0
  %202 = vmatpush1.msra.mxu0 0.0
  %203 = vmatprep.subr.mxu0 0.0
  %204 = vmatpush1.msra.mxu0 0.0
  %205 = vmatprep.subr.mxu0 0.0
  %206 = vmatpush1.msra.mxu0 0.0
  %207 = vmatprep.subr.mxu0 0.0
  %208 = vmatpush1.msra.mxu0 0.0
  %209 = vmatprep.subr.mxu0 0.0
  %210 = vmatpush1.msra.mxu0 0.0
  %211 = vmatprep.subr.mxu0 0.0
  %212 = vmatpush1.msra.mxu0 0.0
  %213 = vmatprep.subr.mxu0 0.0
  %214 = vmatpush1.msra.mxu0 0.0
  %215 = vmatprep.subr.mxu0 0.0
  %216 = vmatpush1.msra.mxu0 0.0
  %217 = vmatprep.subr.mxu0 0.0
  %218 = vmatpush1.msra.mxu0 0.0
  %219 = vmatprep.subr.mxu0 0.0
  %220 = vmatpush1.msra.mxu0 0.0
  %221 = vmatprep.subr.mxu0 0.0
  %222 = vmatpush1.msra.mxu0 0.0
  %223 = vmatprep.subr.mxu0 0.0
  %224 = vmatpush1.msra.mxu0 0.0
  %225 = vmatprep.mubr.f32.mxu0 0.0
  %226 = vmatmul.mubr.f32.gmra.mrb[0].mxu0 %v159
  %v227 = vpop.f32.mrb[0].mxu0
  %v228 = vadd.f32 0.0, %v227
  %v229 = vpop.f32.mrb[0].mxu0
  %v230 = vadd.f32 0.0, %v229
  %231 = vdwg.mxu0
  %v234 = vcombine.low %v228, %v230
  %v236 = vunpack.c.l.s4 1983009808
  %v237 = vunpack.c.0.s8 %v236
  %v238 = vlaneseq
  %v239 = vshrl.u32 %v238, 7
  %v240 = vsub.s32 %v237, %v239
  %v241 = vrot.slane %v234, %v240
  %v243 = vadd.f32 %v157, %v241
  %v244 = vxor.u32 %v243, 2147483648
  %v245 = vmul.f32 %v244, 1.442695
  %v246 = vpow.pop %v245
  %v247 = vadd.f32 %v246, 1.0
  %v248 = vrcp.pop %v247
  %v249 = vmul.f32 1.0, %v248
  %251 = vrot.lane.b32.xlu0 %v243, 64
  %v252 = vpop.permute.xlu0 %251
  %v253 = vrot.slane %v252, 2
  %v255 = vtanh.pop %v253
  %v256 = vmul.f32 %v249, %v141
  %v257 = vmul.f32 %v249, %v255
  %259 = vrot.lane.b32.xlu0 %v257, 64
  %v260 = vpop.permute.xlu0 %259
  %v262 = vadd.f32 %v256, %v260
  %v263 = vtanh.pop %v262
  %v265 = vrot.slane %v249, 2
  %268 = vrot.lane.b32.xlu0 %v263, 64
  %v269 = vpop.permute.xlu0 %268
  %v271 = vmul.f32 %v265, %v269
  %s272 = scalar_lea.vmem %s4, 2
  %273 = vst.msk [vmem:[%s272] sm:$0x3] %vm151, %v271
  %s274 = scalar_lea.vmem %s4, 12
  %275 = vst.msk [vmem:[%s274] sm:$0x3] %vm154, %v271
  %s276 = scalar_lea.vmem %s0, 8
  %v277 = vld [vmem:[%s276] sm:$0xf]
  %v279 = vsel %vm36, %v271, 0
  %281 = vmatprep.subr.mxu0 %v20
  %282 = vmatpush1.msra.mxu0 %v19
  %283 = vmatprep.subr.mxu0 %v22
  %284 = vmatpush1.msra.mxu0 %v21
  %285 = vmatprep.subr.mxu0 %v24
  %286 = vmatpush1.msra.mxu0 %v23
  %287 = vmatprep.subr.mxu0 %v26
  %288 = vmatpush1.msra.mxu0 %v25
  %289 = vmatprep.subr.mxu0 %v28
  %290 = vmatpush1.msra.mxu0 %v27
  %291 = vmatprep.subr.mxu0 %v30
  %292 = vmatpush1.msra.mxu0 %v29
  %293 = vmatprep.subr.mxu0 %v32
  %294 = vmatpush1.msra.mxu0 %v31
  %295 = vmatprep.subr.mxu0 %v34
  %296 = vmatpush1.msra.mxu0 %v33
  %297 = vmatprep.subr.mxu0 0.0
  %298 = vmatpush1.msra.mxu0 0.0
  %299 = vmatprep.subr.mxu0 0.0
  %300 = vmatpush1.msra.mxu0 0.0
  %301 = vmatprep.subr.mxu0 0.0
  %302 = vmatpush1.msra.mxu0 0.0
  %303 = vmatprep.subr.mxu0 0.0
  %304 = vmatpush1.msra.mxu0 0.0
  %305 = vmatprep.subr.mxu0 0.0
  %306 = vmatpush1.msra.mxu0 0.0
  %307 = vmatprep.subr.mxu0 0.0
  %308 = vmatpush1.msra.mxu0 0.0
  %309 = vmatprep.subr.mxu0 0.0
  %310 = vmatpush1.msra.mxu0 0.0
  %311 = vmatprep.subr.mxu0 0.0
  %312 = vmatpush1.msra.mxu0 0.0
  %313 = vmatprep.subr.mxu0 0.0
  %314 = vmatpush1.msra.mxu0 0.0
  %315 = vmatprep.subr.mxu0 0.0
  %316 = vmatpush1.msra.mxu0 0.0
  %317 = vmatprep.subr.mxu0 0.0
  %318 = vmatpush1.msra.mxu0 0.0
  %319 = vmatprep.subr.mxu0 0.0
  %320 = vmatpush1.msra.mxu0 0.0
  %321 = vmatprep.subr.mxu0 0.0
  %322 = vmatpush1.msra.mxu0 0.0
  %323 = vmatprep.subr.mxu0 0.0
  %324 = vmatpush1.msra.mxu0 0.0
  %325 = vmatprep.subr.mxu0 0.0
  %326 = vmatpush1.msra.mxu0 0.0
  %327 = vmatprep.subr.mxu0 0.0
  %328 = vmatpush1.msra.mxu0 0.0
  %329 = vmatprep.subr.mxu0 0.0
  %330 = vmatpush1.msra.mxu0 0.0
  %331 = vmatprep.subr.mxu0 0.0
  %332 = vmatpush1.msra.mxu0 0.0
  %333 = vmatprep.subr.mxu0 0.0
  %334 = vmatpush1.msra.mxu0 0.0
  %335 = vmatprep.subr.mxu0 0.0
  %336 = vmatpush1.msra.mxu0 0.0
  %337 = vmatprep.subr.mxu0 0.0
  %338 = vmatpush1.msra.mxu0 0.0
  %339 = vmatprep.subr.mxu0 0.0
  %340 = vmatpush1.msra.mxu0 0.0
  %341 = vmatprep.subr.mxu0 0.0
  %342 = vmatpush1.msra.mxu0 0.0
  %343 = vmatprep.subr.mxu0 0.0
  %344 = vmatpush1.msra.mxu0 0.0
  %345 = vmatprep.mubr.f32.mxu0 0.0
  %346 = vmatmul.mubr.f32.gmra.mrb[0].mxu0 %v279
  %v347 = vpop.f32.mrb[0].mxu0
  %v348 = vadd.f32 0.0, %v347
  %v349 = vpop.f32.mrb[0].mxu0
  %v350 = vadd.f32 0.0, %v349
  %351 = vdwg.mxu0
  %v354 = vcombine.low %v348, %v350
  %v356 = vunpack.c.l.s4 1983009808
  %v357 = vunpack.c.0.s8 %v356
  %v358 = vlaneseq
  %v359 = vshrl.u32 %v358, 7
  %v360 = vsub.s32 %v357, %v359
  %v361 = vrot.slane %v354, %v360
  %v363 = vadd.f32 %v277, %v361
  %v364 = vxor.u32 %v363, 2147483648
  %v365 = vmul.f32 %v364, 1.442695
  %v366 = vpow.pop %v365
  %v367 = vadd.f32 %v366, 1.0
  %v368 = vrcp.pop %v367
  %v369 = vmul.f32 1.0, %v368
  %371 = vrot.lane.b32.xlu0 %v363, 64
  %v372 = vpop.permute.xlu0 %371
  %v373 = vrot.slane %v372, 2
  %v375 = vtanh.pop %v373
  %v376 = vmul.f32 %v369, %v262
  %v377 = vmul.f32 %v369, %v375
  %379 = vrot.lane.b32.xlu0 %v377, 64
  %v380 = vpop.permute.xlu0 %379
  %v382 = vadd.f32 %v376, %v380
  %v383 = vtanh.pop %v382
  %v385 = vrot.slane %v369, 2
  %388 = vrot.lane.b32.xlu0 %v383, 64
  %v389 = vpop.permute.xlu0 %388
  %v391 = vmul.f32 %v385, %v389
  %s392 = scalar_lea.vmem %s4, 4
  %393 = vst.msk [vmem:[%s392] sm:$0x3] %vm151, %v391
  %s394 = scalar_lea.vmem %s4, 10
  %395 = vst.msk [vmem:[%s394] sm:$0x3] %vm154, %v391
  %s396 = scalar_lea.vmem %s0, 12
  %v397 = vld [vmem:[%s396] sm:$0xf]
  %v399 = vsel %vm36, %v391, 0
  %401 = vmatprep.subr.mxu0 %v20
  %402 = vmatpush1.msra.mxu0 %v19
  %403 = vmatprep.subr.mxu0 %v22
  %404 = vmatpush1.msra.mxu0 %v21
  %405 = vmatprep.subr.mxu0 %v24
  %406 = vmatpush1.msra.mxu0 %v23
  %407 = vmatprep.subr.mxu0 %v26
  %408 = vmatpush1.msra.mxu0 %v25
  %409 = vmatprep.subr.mxu0 %v28
  %410 = vmatpush1.msra.mxu0 %v27
  %411 = vmatprep.subr.mxu0 %v30
  %412 = vmatpush1.msra.mxu0 %v29
  %413 = vmatprep.subr.mxu0 %v32
  %414 = vmatpush1.msra.mxu0 %v31
  %415 = vmatprep.subr.mxu0 %v34
  %416 = vmatpush1.msra.mxu0 %v33
  %417 = vmatprep.subr.mxu0 0.0
  %418 = vmatpush1.msra.mxu0 0.0
  %419 = vmatprep.subr.mxu0 0.0
  %420 = vmatpush1.msra.mxu0 0.0
  %421 = vmatprep.subr.mxu0 0.0
  %422 = vmatpush1.msra.mxu0 0.0
  %423 = vmatprep.subr.mxu0 0.0
  %424 = vmatpush1.msra.mxu0 0.0
  %425 = vmatprep.subr.mxu0 0.0
  %426 = vmatpush1.msra.mxu0 0.0
  %427 = vmatprep.subr.mxu0 0.0
  %428 = vmatpush1.msra.mxu0 0.0
  %429 = vmatprep.subr.mxu0 0.0
  %430 = vmatpush1.msra.mxu0 0.0
  %431 = vmatprep.subr.mxu0 0.0
  %432 = vmatpush1.msra.mxu0 0.0
  %433 = vmatprep.subr.mxu0 0.0
  %434 = vmatpush1.msra.mxu0 0.0
  %435 = vmatprep.subr.mxu0 0.0
  %436 = vmatpush1.msra.mxu0 0.0
  %437 = vmatprep.subr.mxu0 0.0
  %438 = vmatpush1.msra.mxu0 0.0
  %439 = vmatprep.subr.mxu0 0.0
  %440 = vmatpush1.msra.mxu0 0.0
  %441 = vmatprep.subr.mxu0 0.0
  %442 = vmatpush1.msra.mxu0 0.0
  %443 = vmatprep.subr.mxu0 0.0
  %444 = vmatpush1.msra.mxu0 0.0
  %445 = vmatprep.subr.mxu0 0.0
  %446 = vmatpush1.msra.mxu0 0.0
  %447 = vmatprep.subr.mxu0 0.0
  %448 = vmatpush1.msra.mxu0 0.0
  %449 = vmatprep.subr.mxu0 0.0
  %450 = vmatpush1.msra.mxu0 0.0
  %451 = vmatprep.subr.mxu0 0.0
  %452 = vmatpush1.msra.mxu0 0.0
  %453 = vmatprep.subr.mxu0 0.0
  %454 = vmatpush1.msra.mxu0 0.0
  %455 = vmatprep.subr.mxu0 0.0
  %456 = vmatpush1.msra.mxu0 0.0
  %457 = vmatprep.subr.mxu0 0.0
  %458 = vmatpush1.msra.mxu0 0.0
  %459 = vmatprep.subr.mxu0 0.0
  %460 = vmatpush1.msra.mxu0 0.0
  %461 = vmatprep.subr.mxu0 0.0
  %462 = vmatpush1.msra.mxu0 0.0
  %463 = vmatprep.subr.mxu0 0.0
  %464 = vmatpush1.msra.mxu0 0.0
  %465 = vmatprep.mubr.f32.mxu0 0.0
  %466 = vmatmul.mubr.f32.gmra.mrb[0].mxu0 %v399
  %v467 = vpop.f32.mrb[0].mxu0
  %v468 = vadd.f32 0.0, %v467
  %v469 = vpop.f32.mrb[0].mxu0
  %v470 = vadd.f32 0.0, %v469
  %471 = vdwg.mxu0
  %v474 = vcombine.low %v468, %v470
  %v476 = vunpack.c.l.s4 1983009808
  %v477 = vunpack.c.0.s8 %v476
  %v478 = vlaneseq
  %v479 = vshrl.u32 %v478, 7
  %v480 = vsub.s32 %v477, %v479
  %v481 = vrot.slane %v474, %v480
  %v483 = vadd.f32 %v397, %v481
  %v484 = vxor.u32 %v483, 2147483648
  %v485 = vmul.f32 %v484, 1.442695
  %v486 = vpow.pop %v485
  %v487 = vadd.f32 %v486, 1.0
  %v488 = vrcp.pop %v487
  %v489 = vmul.f32 1.0, %v488
  %491 = vrot.lane.b32.xlu0 %v483, 64
  %v492 = vpop.permute.xlu0 %491
  %v493 = vrot.slane %v492, 2
  %v495 = vtanh.pop %v493
  %v496 = vmul.f32 %v489, %v382
  %v497 = vmul.f32 %v489, %v495
  %499 = vrot.lane.b32.xlu0 %v497, 64
  %v500 = vpop.permute.xlu0 %499
  %v502 = vadd.f32 %v496, %v500
  %v503 = vtanh.pop %v502
  %v505 = vrot.slane %v489, 2
  %508 = vrot.lane.b32.xlu0 %v503, 64
  %v509 = vpop.permute.xlu0 %508
  %v511 = vmul.f32 %v505, %v509
  %s512 = scalar_lea.vmem %s4, 6
  %513 = vst.msk [vmem:[%s512] sm:$0x3] %vm151, %v511
  %s514 = scalar_lea.vmem %s4, 8
  %515 = vst.msk [vmem:[%s514] sm:$0x3] %vm154, %v511
  %s516 = scalar_lea.vmem %s0, 16
  %v517 = vld [vmem:[%s516] sm:$0xf]
  %v519 = vsel %vm36, %v511, 0
  %521 = vmatprep.subr.mxu0 %v20
  %522 = vmatpush1.msra.mxu0 %v19
  %523 = vmatprep.subr.mxu0 %v22
  %524 = vmatpush1.msra.mxu0 %v21
  %525 = vmatprep.subr.mxu0 %v24
  %526 = vmatpush1.msra.mxu0 %v23
  %527 = vmatprep.subr.mxu0 %v26
  %528 = vmatpush1.msra.mxu0 %v25
  %529 = vmatprep.subr.mxu0 %v28
  %530 = vmatpush1.msra.mxu0 %v27
  %531 = vmatprep.subr.mxu0 %v30
  %532 = vmatpush1.msra.mxu0 %v29
  %533 = vmatprep.subr.mxu0 %v32
  %534 = vmatpush1.msra.mxu0 %v31
  %535 = vmatprep.subr.mxu0 %v34
  %536 = vmatpush1.msra.mxu0 %v33
  %537 = vmatprep.subr.mxu0 0.0
  %538 = vmatpush1.msra.mxu0 0.0
  %539 = vmatprep.subr.mxu0 0.0
  %540 = vmatpush1.msra.mxu0 0.0
  %541 = vmatprep.subr.mxu0 0.0
  %542 = vmatpush1.msra.mxu0 0.0
  %543 = vmatprep.subr.mxu0 0.0
  %544 = vmatpush1.msra.mxu0 0.0
  %545 = vmatprep.subr.mxu0 0.0
  %546 = vmatpush1.msra.mxu0 0.0
  %547 = vmatprep.subr.mxu0 0.0
  %548 = vmatpush1.msra.mxu0 0.0
  %549 = vmatprep.subr.mxu0 0.0
  %550 = vmatpush1.msra.mxu0 0.0
  %551 = vmatprep.subr.mxu0 0.0
  %552 = vmatpush1.msra.mxu0 0.0
  %553 = vmatprep.subr.mxu0 0.0
  %554 = vmatpush1.msra.mxu0 0.0
  %555 = vmatprep.subr.mxu0 0.0
  %556 = vmatpush1.msra.mxu0 0.0
  %557 = vmatprep.subr.mxu0 0.0
  %558 = vmatpush1.msra.mxu0 0.0
  %559 = vmatprep.subr.mxu0 0.0
  %560 = vmatpush1.msra.mxu0 0.0
  %561 = vmatprep.subr.mxu0 0.0
  %562 = vmatpush1.msra.mxu0 0.0
  %563 = vmatprep.subr.mxu0 0.0
  %564 = vmatpush1.msra.mxu0 0.0
  %565 = vmatprep.subr.mxu0 0.0
  %566 = vmatpush1.msra.mxu0 0.0
  %567 = vmatprep.subr.mxu0 0.0
  %568 = vmatpush1.msra.mxu0 0.0
  %569 = vmatprep.subr.mxu0 0.0
  %570 = vmatpush1.msra.mxu0 0.0
  %571 = vmatprep.subr.mxu0 0.0
  %572 = vmatpush1.msra.mxu0 0.0
  %573 = vmatprep.subr.mxu0 0.0
  %574 = vmatpush1.msra.mxu0 0.0
  %575 = vmatprep.subr.mxu0 0.0
  %576 = vmatpush1.msra.mxu0 0.0
  %577 = vmatprep.subr.mxu0 0.0
  %578 = vmatpush1.msra.mxu0 0.0
  %579 = vmatprep.subr.mxu0 0.0
  %580 = vmatpush1.msra.mxu0 0.0
  %581 = vmatprep.subr.mxu0 0.0
  %582 = vmatpush1.msra.mxu0 0.0
  %583 = vmatprep.subr.mxu0 0.0
  %584 = vmatpush1.msra.mxu0 0.0
  %585 = vmatprep.mubr.f32.mxu0 0.0
  %586 = vmatmul.mubr.f32.gmra.mrb[0].mxu0 %v519
  %v587 = vpop.f32.mrb[0].mxu0
  %v588 = vadd.f32 0.0, %v587
  %v589 = vpop.f32.mrb[0].mxu0
  %v590 = vadd.f32 0.0, %v589
  %591 = vdwg.mxu0
  %v594 = vcombine.low %v588, %v590
  %v596 = vunpack.c.l.s4 1983009808
  %v597 = vunpack.c.0.s8 %v596
  %v598 = vlaneseq
  %v599 = vshrl.u32 %v598, 7
  %v600 = vsub.s32 %v597, %v599
  %v601 = vrot.slane %v594, %v600
  %v603 = vadd.f32 %v517, %v601
  %v604 = vxor.u32 %v603, 2147483648
  %v605 = vmul.f32 %v604, 1.442695
  %v606 = vpow.pop %v605
  %v607 = vadd.f32 %v606, 1.0
  %v608 = vrcp.pop %v607
  %v609 = vmul.f32 1.0, %v608
  %611 = vrot.lane.b32.xlu0 %v603, 64
  %v612 = vpop.permute.xlu0 %611
  %v613 = vrot.slane %v612, 2
  %v615 = vtanh.pop %v613
  %v616 = vmul.f32 %v609, %v502
  %v617 = vmul.f32 %v609, %v615
  %619 = vrot.lane.b32.xlu0 %v617, 64
  %v620 = vpop.permute.xlu0 %619
  %v622 = vadd.f32 %v616, %v620
  %v623 = vtanh.pop %v622
  %v625 = vrot.slane %v609, 2
  %628 = vrot.lane.b32.xlu0 %v623, 64
  %v629 = vpop.permute.xlu0 %628
  %v631 = vmul.f32 %v625, %v629
  %632 = vst.msk [vmem:[%s514] sm:$0x3] %vm151, %v631
  %633 = vst.msk [vmem:[%s512] sm:$0x3] %vm154, %v631
  %s634 = scalar_lea.vmem %s0, 20
  %v635 = vld [vmem:[%s634] sm:$0xf]
  %v637 = vsel %vm36, %v631, 0
  %639 = vmatprep.subr.mxu0 %v20
  %640 = vmatpush1.msra.mxu0 %v19
  %641 = vmatprep.subr.mxu0 %v22
  %642 = vmatpush1.msra.mxu0 %v21
  %643 = vmatprep.subr.mxu0 %v24
  %644 = vmatpush1.msra.mxu0 %v23
  %645 = vmatprep.subr.mxu0 %v26
  %646 = vmatpush1.msra.mxu0 %v25
  %647 = vmatprep.subr.mxu0 %v28
  %648 = vmatpush1.msra.mxu0 %v27
  %649 = vmatprep.subr.mxu0 %v30
  %650 = vmatpush1.msra.mxu0 %v29
  %651 = vmatprep.subr.mxu0 %v32
  %652 = vmatpush1.msra.mxu0 %v31
  %653 = vmatprep.subr.mxu0 %v34
  %654 = vmatpush1.msra.mxu0 %v33
  %655 = vmatprep.subr.mxu0 0.0
  %656 = vmatpush1.msra.mxu0 0.0
  %657 = vmatprep.subr.mxu0 0.0
  %658 = vmatpush1.msra.mxu0 0.0
  %659 = vmatprep.subr.mxu0 0.0
  %660 = vmatpush1.msra.mxu0 0.0
  %661 = vmatprep.subr.mxu0 0.0
  %662 = vmatpush1.msra.mxu0 0.0
  %663 = vmatprep.subr.mxu0 0.0
  %664 = vmatpush1.msra.mxu0 0.0
  %665 = vmatprep.subr.mxu0 0.0
  %666 = vmatpush1.msra.mxu0 0.0
  %667 = vmatprep.subr.mxu0 0.0
  %668 = vmatpush1.msra.mxu0 0.0
  %669 = vmatprep.subr.mxu0 0.0
  %670 = vmatpush1.msra.mxu0 0.0
  %671 = vmatprep.subr.mxu0 0.0
  %672 = vmatpush1.msra.mxu0 0.0
  %673 = vmatprep.subr.mxu0 0.0
  %674 = vmatpush1.msra.mxu0 0.0
  %675 = vmatprep.subr.mxu0 0.0
  %676 = vmatpush1.msra.mxu0 0.0
  %677 = vmatprep.subr.mxu0 0.0
  %678 = vmatpush1.msra.mxu0 0.0
  %679 = vmatprep.subr.mxu0 0.0
  %680 = vmatpush1.msra.mxu0 0.0
  %681 = vmatprep.subr.mxu0 0.0
  %682 = vmatpush1.msra.mxu0 0.0
  %683 = vmatprep.subr.mxu0 0.0
  %684 = vmatpush1.msra.mxu0 0.0
  %685 = vmatprep.subr.mxu0 0.0
  %686 = vmatpush1.msra.mxu0 0.0
  %687 = vmatprep.subr.mxu0 0.0
  %688 = vmatpush1.msra.mxu0 0.0
  %689 = vmatprep.subr.mxu0 0.0
  %690 = vmatpush1.msra.mxu0 0.0
  %691 = vmatprep.subr.mxu0 0.0
  %692 = vmatpush1.msra.mxu0 0.0
  %693 = vmatprep.subr.mxu0 0.0
  %694 = vmatpush1.msra.mxu0 0.0
  %695 = vmatprep.subr.mxu0 0.0
  %696 = vmatpush1.msra.mxu0 0.0
  %697 = vmatprep.subr.mxu0 0.0
  %698 = vmatpush1.msra.mxu0 0.0
  %699 = vmatprep.subr.mxu0 0.0
  %700 = vmatpush1.msra.mxu0 0.0
  %701 = vmatprep.subr.mxu0 0.0
  %702 = vmatpush1.msra.mxu0 0.0
  %703 = vmatprep.mubr.f32.mxu0 0.0
  %704 = vmatmul.mubr.f32.gmra.mrb[0].mxu0 %v637
  %v705 = vpop.f32.mrb[0].mxu0
  %v706 = vadd.f32 0.0, %v705
  %v707 = vpop.f32.mrb[0].mxu0
  %v708 = vadd.f32 0.0, %v707
  %709 = vdwg.mxu0
  %v712 = vcombine.low %v706, %v708
  %v714 = vunpack.c.l.s4 1983009808
  %v715 = vunpack.c.0.s8 %v714
  %v716 = vlaneseq
  %v717 = vshrl.u32 %v716, 7
  %v718 = vsub.s32 %v715, %v717
  %v719 = vrot.slane %v712, %v718
  %v721 = vadd.f32 %v635, %v719
  %v722 = vxor.u32 %v721, 2147483648
  %v723 = vmul.f32 %v722, 1.442695
  %v724 = vpow.pop %v723
  %v725 = vadd.f32 %v724, 1.0
  %v726 = vrcp.pop %v725
  %v727 = vmul.f32 1.0, %v726
  %729 = vrot.lane.b32.xlu0 %v721, 64
  %v730 = vpop.permute.xlu0 %729
  %v731 = vrot.slane %v730, 2
  %v733 = vtanh.pop %v731
  %v734 = vmul.f32 %v727, %v622
  %v735 = vmul.f32 %v727, %v733
  %737 = vrot.lane.b32.xlu0 %v735, 64
  %v738 = vpop.permute.xlu0 %737
  %v740 = vadd.f32 %v734, %v738
  %v741 = vtanh.pop %v740
  %v743 = vrot.slane %v727, 2
  %746 = vrot.lane.b32.xlu0 %v741, 64
  %v747 = vpop.permute.xlu0 %746
  %v749 = vmul.f32 %v743, %v747
  %750 = vst.msk [vmem:[%s394] sm:$0x3] %vm151, %v749
  %751 = vst.msk [vmem:[%s392] sm:$0x3] %vm154, %v749
  %s752 = scalar_lea.vmem %s0, 24
  %v753 = vld [vmem:[%s752] sm:$0xf]
  %v755 = vsel %vm36, %v749, 0
  %757 = vmatprep.subr.mxu0 %v20
  %758 = vmatpush1.msra.mxu0 %v19
  %759 = vmatprep.subr.mxu0 %v22
  %760 = vmatpush1.msra.mxu0 %v21
  %761 = vmatprep.subr.mxu0 %v24
  %762 = vmatpush1.msra.mxu0 %v23
  %763 = vmatprep.subr.mxu0 %v26
  %764 = vmatpush1.msra.mxu0 %v25
  %765 = vmatprep.subr.mxu0 %v28
  %766 = vmatpush1.msra.mxu0 %v27
  %767 = vmatprep.subr.mxu0 %v30
  %768 = vmatpush1.msra.mxu0 %v29
  %769 = vmatprep.subr.mxu0 %v32
  %770 = vmatpush1.msra.mxu0 %v31
  %771 = vmatprep.subr.mxu0 %v34
  %772 = vmatpush1.msra.mxu0 %v33
  %773 = vmatprep.subr.mxu0 0.0
  %774 = vmatpush1.msra.mxu0 0.0
  %775 = vmatprep.subr.mxu0 0.0
  %776 = vmatpush1.msra.mxu0 0.0
  %777 = vmatprep.subr.mxu0 0.0
  %778 = vmatpush1.msra.mxu0 0.0
  %779 = vmatprep.subr.mxu0 0.0
  %780 = vmatpush1.msra.mxu0 0.0
  %781 = vmatprep.subr.mxu0 0.0
  %782 = vmatpush1.msra.mxu0 0.0
  %783 = vmatprep.subr.mxu0 0.0
  %784 = vmatpush1.msra.mxu0 0.0
  %785 = vmatprep.subr.mxu0 0.0
  %786 = vmatpush1.msra.mxu0 0.0
  %787 = vmatprep.subr.mxu0 0.0
  %788 = vmatpush1.msra.mxu0 0.0
  %789 = vmatprep.subr.mxu0 0.0
  %790 = vmatpush1.msra.mxu0 0.0
  %791 = vmatprep.subr.mxu0 0.0
  %792 = vmatpush1.msra.mxu0 0.0
  %793 = vmatprep.subr.mxu0 0.0
  %794 = vmatpush1.msra.mxu0 0.0
  %795 = vmatprep.subr.mxu0 0.0
  %796 = vmatpush1.msra.mxu0 0.0
  %797 = vmatprep.subr.mxu0 0.0
  %798 = vmatpush1.msra.mxu0 0.0
  %799 = vmatprep.subr.mxu0 0.0
  %800 = vmatpush1.msra.mxu0 0.0
  %801 = vmatprep.subr.mxu0 0.0
  %802 = vmatpush1.msra.mxu0 0.0
  %803 = vmatprep.subr.mxu0 0.0
  %804 = vmatpush1.msra.mxu0 0.0
  %805 = vmatprep.subr.mxu0 0.0
  %806 = vmatpush1.msra.mxu0 0.0
  %807 = vmatprep.subr.mxu0 0.0
  %808 = vmatpush1.msra.mxu0 0.0
  %809 = vmatprep.subr.mxu0 0.0
  %810 = vmatpush1.msra.mxu0 0.0
  %811 = vmatprep.subr.mxu0 0.0
  %812 = vmatpush1.msra.mxu0 0.0
  %813 = vmatprep.subr.mxu0 0.0
  %814 = vmatpush1.msra.mxu0 0.0
  %815 = vmatprep.subr.mxu0 0.0
  %816 = vmatpush1.msra.mxu0 0.0
  %817 = vmatprep.subr.mxu0 0.0
  %818 = vmatpush1.msra.mxu0 0.0
  %819 = vmatprep.subr.mxu0 0.0
  %820 = vmatpush1.msra.mxu0 0.0
  %821 = vmatprep.mubr.f32.mxu0 0.0
  %822 = vmatmul.mubr.f32.gmra.mrb[0].mxu0 %v755
  %v823 = vpop.f32.mrb[0].mxu0
  %v824 = vadd.f32 0.0, %v823
  %v825 = vpop.f32.mrb[0].mxu0
  %v826 = vadd.f32 0.0, %v825
  %827 = vdwg.mxu0
  %v830 = vcombine.low %v824, %v826
  %v832 = vunpack.c.l.s4 1983009808
  %v833 = vunpack.c.0.s8 %v832
  %v834 = vlaneseq
  %v835 = vshrl.u32 %v834, 7
  %v836 = vsub.s32 %v833, %v835
  %v837 = vrot.slane %v830, %v836
  %v839 = vadd.f32 %v753, %v837
  %v840 = vxor.u32 %v839, 2147483648
  %v841 = vmul.f32 %v840, 1.442695
  %v842 = vpow.pop %v841
  %v843 = vadd.f32 %v842, 1.0
  %v844 = vrcp.pop %v843
  %v845 = vmul.f32 1.0, %v844
  %847 = vrot.lane.b32.xlu0 %v839, 64
  %v848 = vpop.permute.xlu0 %847
  %v849 = vrot.slane %v848, 2
  %v851 = vtanh.pop %v849
  %v852 = vmul.f32 %v845, %v740
  %v853 = vmul.f32 %v845, %v851
  %855 = vrot.lane.b32.xlu0 %v853, 64
  %v856 = vpop.permute.xlu0 %855
  %v858 = vadd.f32 %v852, %v856
  %v859 = vtanh.pop %v858
  %v861 = vrot.slane %v845, 2
  %864 = vrot.lane.b32.xlu0 %v859, 64
  %v865 = vpop.permute.xlu0 %864
  %v867 = vmul.f32 %v861, %v865
  %868 = vst.msk [vmem:[%s274] sm:$0x3] %vm151, %v867
  %869 = vst.msk [vmem:[%s272] sm:$0x3] %vm154, %v867
  %s870 = scalar_lea.vmem %s0, 28
  %v871 = vld [vmem:[%s870] sm:$0xf]
  %v873 = vsel %vm36, %v867, 0
  %875 = vmatprep.subr.mxu0 %v20
  %876 = vmatpush1.msra.mxu0 %v19
  %877 = vmatprep.subr.mxu0 %v22
  %878 = vmatpush1.msra.mxu0 %v21
  %879 = vmatprep.subr.mxu0 %v24
  %880 = vmatpush1.msra.mxu0 %v23
  %881 = vmatprep.subr.mxu0 %v26
  %882 = vmatpush1.msra.mxu0 %v25
  %883 = vmatprep.subr.mxu0 %v28
  %884 = vmatpush1.msra.mxu0 %v27
  %885 = vmatprep.subr.mxu0 %v30
  %886 = vmatpush1.msra.mxu0 %v29
  %887 = vmatprep.subr.mxu0 %v32
  %888 = vmatpush1.msra.mxu0 %v31
  %889 = vmatprep.subr.mxu0 %v34
  %890 = vmatpush1.msra.mxu0 %v33
  %891 = vmatprep.subr.mxu0 0.0
  %892 = vmatpush1.msra.mxu0 0.0
  %893 = vmatprep.subr.mxu0 0.0
  %894 = vmatpush1.msra.mxu0 0.0
  %895 = vmatprep.subr.mxu0 0.0
  %896 = vmatpush1.msra.mxu0 0.0
  %897 = vmatprep.subr.mxu0 0.0
  %898 = vmatpush1.msra.mxu0 0.0
  %899 = vmatprep.subr.mxu0 0.0
  %900 = vmatpush1.msra.mxu0 0.0
  %901 = vmatprep.subr.mxu0 0.0
  %902 = vmatpush1.msra.mxu0 0.0
  %903 = vmatprep.subr.mxu0 0.0
  %904 = vmatpush1.msra.mxu0 0.0
  %905 = vmatprep.subr.mxu0 0.0
  %906 = vmatpush1.msra.mxu0 0.0
  %907 = vmatprep.subr.mxu0 0.0
  %908 = vmatpush1.msra.mxu0 0.0
  %909 = vmatprep.subr.mxu0 0.0
  %910 = vmatpush1.msra.mxu0 0.0
  %911 = vmatprep.subr.mxu0 0.0
  %912 = vmatpush1.msra.mxu0 0.0
  %913 = vmatprep.subr.mxu0 0.0
  %914 = vmatpush1.msra.mxu0 0.0
  %915 = vmatprep.subr.mxu0 0.0
  %916 = vmatpush1.msra.mxu0 0.0
  %917 = vmatprep.subr.mxu0 0.0
  %918 = vmatpush1.msra.mxu0 0.0
  %919 = vmatprep.subr.mxu0 0.0
  %920 = vmatpush1.msra.mxu0 0.0
  %921 = vmatprep.subr.mxu0 0.0
  %922 = vmatpush1.msra.mxu0 0.0
  %923 = vmatprep.subr.mxu0 0.0
  %924 = vmatpush1.msra.mxu0 0.0
  %925 = vmatprep.subr.mxu0 0.0
  %926 = vmatpush1.msra.mxu0 0.0
  %927 = vmatprep.subr.mxu0 0.0
  %928 = vmatpush1.msra.mxu0 0.0
  %929 = vmatprep.subr.mxu0 0.0
  %930 = vmatpush1.msra.mxu0 0.0
  %931 = vmatprep.subr.mxu0 0.0
  %932 = vmatpush1.msra.mxu0 0.0
  %933 = vmatprep.subr.mxu0 0.0
  %934 = vmatpush1.msra.mxu0 0.0
  %935 = vmatprep.subr.mxu0 0.0
  %936 = vmatpush1.msra.mxu0 0.0
  %937 = vmatprep.subr.mxu0 0.0
  %938 = vmatpush1.msra.mxu0 0.0
  %939 = vmatprep.mubr.f32.mxu0 0.0
  %940 = vmatmul.mubr.f32.gmra.mrb[0].mxu0 %v873
  %v941 = vpop.f32.mrb[0].mxu0
  %v942 = vadd.f32 0.0, %v941
  %v943 = vpop.f32.mrb[0].mxu0
  %v944 = vadd.f32 0.0, %v943
  %945 = vdwg.mxu0
  %v948 = vcombine.low %v942, %v944
  %v950 = vunpack.c.l.s4 1983009808
  %v951 = vunpack.c.0.s8 %v950
  %v952 = vlaneseq
  %v953 = vshrl.u32 %v952, 7
  %v954 = vsub.s32 %v951, %v953
  %v955 = vrot.slane %v948, %v954
  %v957 = vadd.f32 %v871, %v955
  %v958 = vxor.u32 %v957, 2147483648
  %v959 = vmul.f32 %v958, 1.442695
  %v960 = vpow.pop %v959
  %v961 = vadd.f32 %v960, 1.0
  %v962 = vrcp.pop %v961
  %v963 = vmul.f32 1.0, %v962
  %965 = vrot.lane.b32.xlu0 %v957, 64
  %v966 = vpop.permute.xlu0 %965
  %v967 = vrot.slane %v966, 2
  %v969 = vtanh.pop %v967
  %v970 = vmul.f32 %v963, %v858
  %v971 = vmul.f32 %v963, %v969
  %973 = vrot.lane.b32.xlu0 %v971, 64
  %v974 = vpop.permute.xlu0 %973
  %v976 = vadd.f32 %v970, %v974
  %v977 = vtanh.pop %v976
  %v979 = vrot.slane %v963, 2
  %982 = vrot.lane.b32.xlu0 %v977, 64
  %v983 = vpop.permute.xlu0 %982
  %v985 = vmul.f32 %v979, %v983
  %986 = vst.msk [vmem:[%s153] sm:$0x3] %vm151, %v985
  %987 = vst.msk [vmem:[%s4] sm:$0x3] %vm154, %v985
  %v988 = vsel %vm36, %v985, %v976
  %v989 = vld [vmem:[%s2] sm:$0xff]
  %v990 = vld [vmem:[%s2 + $0x8] sm:$0xff]
  %v991 = vld [vmem:[%s2 + $0x10] sm:$0xff]
  %v992 = vld [vmem:[%s2 + $0x18] sm:$0xff]
  %v993 = vld [vmem:[%s2 + $0x20] sm:$0xff]
  %v994 = vld [vmem:[%s2 + $0x28] sm:$0xff]
  %v995 = vld [vmem:[%s2 + $0x30] sm:$0xff]
  %v996 = vld [vmem:[%s2 + $0x38] sm:$0xff]
  %v997 = vld [vmem:[%s2 + $0x40] sm:$0xff]
  %v998 = vld [vmem:[%s2 + $0x48] sm:$0xff]
  %v999 = vld [vmem:[%s2 + $0x50] sm:$0xff]
  %v1000 = vld [vmem:[%s2 + $0x58] sm:$0xff]
  %v1001 = vld [vmem:[%s2 + $0x60] sm:$0xff]
  %v1002 = vld [vmem:[%s2 + $0x68] sm:$0xff]
  %v1003 = vld [vmem:[%s2 + $0x70] sm:$0xff]
  %v1004 = vld [vmem:[%s2 + $0x78] sm:$0xff]
  %v1005 = vld [vmem:[%s3] sm:$0x1]
  %v1007 = vlaneseq
  %v1008 = vshrl.u32 %v1007, 7
  %v1009 = vsub.s32 0, %v1008
  %v1010 = vrot.slane %v1005, %v1009
  %1012 = vmatprep.subr.mxu0 0.0
  %1013 = vmatpush1.msra.mxu0 %v989
  %1014 = vmatprep.subr.mxu0 0.0
  %1015 = vmatpush1.msra.mxu0 %v990
  %1016 = vmatprep.subr.mxu0 0.0
  %1017 = vmatpush1.msra.mxu0 %v991
  %1018 = vmatprep.subr.mxu0 0.0
  %1019 = vmatpush1.msra.mxu0 %v992
  %1020 = vmatprep.subr.mxu0 0.0
  %1021 = vmatpush1.msra.mxu0 %v993
  %1022 = vmatprep.subr.mxu0 0.0
  %1023 = vmatpush1.msra.mxu0 %v994
  %1024 = vmatprep.subr.mxu0 0.0
  %1025 = vmatpush1.msra.mxu0 %v995
  %1026 = vmatprep.subr.mxu0 0.0
  %1027 = vmatpush1.msra.mxu0 %v996
  %1028 = vmatprep.subr.mxu0 0.0
  %1029 = vmatpush1.msra.mxu0 %v997
  %1030 = vmatprep.subr.mxu0 0.0
  %1031 = vmatpush1.msra.mxu0 %v998
  %1032 = vmatprep.subr.mxu0 0.0
  %1033 = vmatpush1.msra.mxu0 %v999
  %1034 = vmatprep.subr.mxu0 0.0
  %1035 = vmatpush1.msra.mxu0 %v1000
  %1036 = vmatprep.subr.mxu0 0.0
  %1037 = vmatpush1.msra.mxu0 %v1001
  %1038 = vmatprep.subr.mxu0 0.0
  %1039 = vmatpush1.msra.mxu0 %v1002
  %1040 = vmatprep.subr.mxu0 0.0
  %1041 = vmatpush1.msra.mxu0 %v1003
  %1042 = vmatprep.subr.mxu0 0.0
  %1043 = vmatpush1.msra.mxu0 %v1004
  %1044 = vmatprep.subr.mxu0 0.0
  %1045 = vmatpush1.msra.mxu0 0.0
  %1046 = vmatprep.subr.mxu0 0.0
  %1047 = vmatpush1.msra.mxu0 0.0
  %1048 = vmatprep.subr.mxu0 0.0
  %1049 = vmatpush1.msra.mxu0 0.0
  %1050 = vmatprep.subr.mxu0 0.0
  %1051 = vmatpush1.msra.mxu0 0.0
  %1052 = vmatprep.subr.mxu0 0.0
  %1053 = vmatpush1.msra.mxu0 0.0
  %1054 = vmatprep.subr.mxu0 0.0
  %1055 = vmatpush1.msra.mxu0 0.0
  %1056 = vmatprep.subr.mxu0 0.0
  %1057 = vmatpush1.msra.mxu0 0.0
  %1058 = vmatprep.subr.mxu0 0.0
  %1059 = vmatpush1.msra.mxu0 0.0
  %1060 = vmatprep.subr.mxu0 0.0
  %1061 = vmatpush1.msra.mxu0 0.0
  %1062 = vmatprep.subr.mxu0 0.0
  %1063 = vmatpush1.msra.mxu0 0.0
  %1064 = vmatprep.subr.mxu0 0.0
  %1065 = vmatpush1.msra.mxu0 0.0
  %1066 = vmatprep.subr.mxu0 0.0
  %1067 = vmatpush1.msra.mxu0 0.0
  %1068 = vmatprep.subr.mxu0 0.0
  %1069 = vmatpush1.msra.mxu0 0.0
  %1070 = vmatprep.subr.mxu0 0.0
  %1071 = vmatpush1.msra.mxu0 0.0
  %1072 = vmatprep.subr.mxu0 0.0
  %1073 = vmatpush1.msra.mxu0 0.0
  %1074 = vmatprep.subr.mxu0 0.0
  %1075 = vmatpush1.msra.mxu0 0.0
  %1076 = vmatprep.mubr.f32.mxu0 0.0
  %1077 = vmatmul.mubr.f32.gmra.mrb[0].mxu0 %v988
  %v1078 = vpop.f32.mrb[0].mxu0
  %v1079 = vadd.f32 %v1010, %v1078
  %v1080 = vpop.f32.mrb[0].mxu0
  %1081 = vdwg.mxu0
  %vm1082 = vcmask 517120
  %1083 = vst.msk [vmem:[%s5] sm:$0x3] %vm1082, %v1079
  // Predicated region
  $region18: #{lstm_encoder_forward.1} parent=0 // pred_check
    _
  $region19: #{lstm_encoder_forward.1} parent=0 // pred_check_branch
    %1085 = sbr.rel (0) target = $region21
  $region20: #{lstm_encoder_forward.1} parent=0 // pred_region
    _
  $region21: #{lstm_encoder_forward.1} parent=0 // pred_fallthru
    _
  // Predicated region
  $region22: #{lstm_encoder_forward.1} parent=0 // pred_check
    _
  $region23: #{lstm_encoder_forward.1} parent=0 // pred_check_branch
    %1087 = sbr.rel (0) target = $region25
  $region24: #{lstm_encoder_forward.1} parent=0 // pred_region
    _
  $region25: #{lstm_encoder_forward.1} parent=0 // pred_fallthru
    _
  // Predicated region
  $region26: #{lstm_encoder_forward.1} parent=0 // pred_check
    _
  $region27: #{lstm_encoder_forward.1} parent=0 // pred_check_branch
    %1089 = sbr.rel (0) target = $region29
  $region28: #{lstm_encoder_forward.1} parent=0 // pred_region
    _
  $region29: #{lstm_encoder_forward.1} parent=0 // pred_fallthru
    _
  // Predicated region
  $region30: #{lstm_encoder_forward.1} parent=0 // pred_check
    _
  $region31: #{lstm_encoder_forward.1} parent=0 // pred_check_branch
    %1091 = sbr.rel (0) target = $region33
  $region32: #{lstm_encoder_forward.1} parent=0 // pred_region
    _
  $region33: #{lstm_encoder_forward.1} parent=0 // pred_fallthru
    _

</llo_original>
